<compile_context>
chip_gen: v6e
topology: v6e:2x2x1
jax: 0.10.0
libtpu: 0.0.40
codegen_flags: <defaults>
</compile_context>

<pallas_src>
import numpy as np
import jax
import jax.numpy as jnp
from jax import lax
from jax.experimental import pallas as pl
from jax.experimental.pallas import tpu as pltpu

L0 = 620          # conv1 input length (hard-coded by the forward's reshape)
L1 = L0 // 2      # 310 after pool1
L2 = L1 // 2      # 155 after pool2
C1 = 32           # conv1 out channels
C2 = 64           # conv2 out channels
FLAT = C2 * L2    # 9920 flattened features
H1 = 128          # fc1 out features


# ---------------------------------------------------------------------------
# Small in-kernel shift helpers (lane slice + concat; no negative-shift rolls).
# ---------------------------------------------------------------------------
def _shift_prev(a):
    """out[..., l] = a[..., l-1], zero at l == 0  (conv 'same' left pad)."""
    return jnp.concatenate([jnp.zeros_like(a[..., :1]), a[..., :-1]], axis=-1)


def _shift_next(a):
    """out[..., l] = a[..., l+1], zero at the last position (conv 'same' right pad)."""
    return jnp.concatenate([a[..., 1:], jnp.zeros_like(a[..., :1])], axis=-1)


def _shift_next_edge(a):
    """out[..., l] = a[..., l+1]; last column replicates a[..., -1].  Only used for the
    pairwise pooling max, where the last (odd) position is discarded anyway."""
    return jnp.concatenate([a[..., 1:], a[..., -1:]], axis=-1)


# ---------------------------------------------------------------------------
# Fused kernel: conv1 -> pool1 -> conv2 -> pool2 -> (collapsed fc1.fc2) per batch block.
# ---------------------------------------------------------------------------
def fused_kernel(x_ref, w1b1_ref, w2b2_ref, se1_ref, v2_ref, beff_ref, out_ref):
    bblk = x_ref.shape[1]

    w1b1 = w1b1_ref[...]                       # (C1, 4)   conv1 taps | bias
    w2 = w2b2_ref[:, 0:3 * C1]                 # (C2, 96)  conv2 packed taps [k=0 | k=1 | k=2]
    b2 = w2b2_ref[:, 3 * C1:3 * C1 + 1][None]  # (1, C2, 1)
    se1 = se1_ref[...]                         # (L0, L1)  even-lane selector for pool1
    v2 = v2_ref[...]                           # (C2, L1)  collapsed fc weight, zero on odd lanes
    b_eff = beff_ref[0, 0]                     # scalar    collapsed fc bias

    x = x_ref[0]                               # (bblk, L0)

    # conv1 (k=3, padding=1) on the VPU: broadcast-MAC over shifted copies.
    y1 = (_shift_prev(x)[:, None, :] * w1b1[None, :, 0:1]
          + x[:, None, :]            * w1b1[None, :, 1:2]
          + _shift_next(x)[:, None, :] * w1b1[None, :, 2:3]
          + w1b1[None, :, 3:4])                # (bblk, C1, L0)
    y1 = y1.reshape(bblk * C1, L0)

    # pool1: pairwise max, then ONE batched even-lane selection matmul (M = bblk*C1).
    m1 = jnp.maximum(y1, _shift_next_edge(y1))
    p1 = jnp.dot(m1, se1, preferred_element_type=jnp.float32)          # (bblk*C1, L1)

    # conv2: pack the 3 taps along channels, one batched K=96 matmul for the whole block.
    p1_stack = jnp.concatenate(
        [_shift_prev(p1).reshape(bblk, C1, L1),
         p1.reshape(bblk, C1, L1),
         _shift_next(p1).reshape(bblk, C1, L1)], axis=1)               # (bblk, 3*C1, L1)
    w2b = jnp.broadcast_to(w2[None], (bblk, C2, 3 * C1))
    y2 = lax.dot_general(w2b, p1_stack,
                         dimension_numbers=(((2,), (1,)), ((0,), (0,))),
                         preferred_element_type=jnp.float32) + b2      # (bblk, C2, L1)

    # pool2 + flatten + fc1 + fc2 (affine collapse): pairwise max, then a weighted reduction
    # against v2 (collapsed fc weight expanded with zeros on the discarded odd positions).
    y2_2d = y2.reshape(bblk * C2, L1)
    m2 = jnp.maximum(y2_2d, _shift_next_edge(y2_2d)).reshape(bblk, C2, L1)
    acc = jnp.sum(m2 * v2[None], axis=2, keepdims=True)                # (bblk, C2, 1)
    out_ref[0] = jnp.sum(acc, axis=1) + b_eff                          # (bblk, 1)


# ---------------------------------------------------------------------------
# One-time parameter packing (do this OUTSIDE the per-call forward).
# ---------------------------------------------------------------------------
def _even_select(n):
    """(n, n//2) 0/1 matrix picking even lanes: out[:, j] = in[:, 2j]."""
    i = jnp.arange(n)[:, None]
    j = jnp.arange(n // 2)[None, :]
    return (i == 2 * j).astype(jnp.float32)


def pack_params(params):
    w1, b1, w2, b2, wfc1, bfc1, wfc2, bfc2 = params
    w1b1 = jnp.concatenate([w1.reshape(C1, 3), b1.reshape(C1, 1)], axis=1)        # (32, 4)
    w2b2 = jnp.concatenate([w2[:, :, 0], w2[:, :, 1], w2[:, :, 2],
                            b2.reshape(C2, 1)], axis=1)                           # (64, 97)
    se1 = _even_select(L0)                                                        # (620, 310)
    # fc1.fc2 collapse (exact: no activation between them in this module).
    w_eff = jnp.matmul(wfc2, wfc1, precision=lax.Precision.HIGHEST).reshape(C2, L2)
    v2 = jnp.zeros((C2, L1), jnp.float32).at[:, 0::2].set(w_eff)                  # (64, 310)
    b_eff = (jnp.matmul(wfc2, bfc1[:, None], precision=lax.Precision.HIGHEST)
             .reshape(1, 1) + bfc2.reshape(1, 1))                                 # (1, 1)
    return w1b1, w2b2, se1, v2, b_eff


# ---------------------------------------------------------------------------
# Forward wrapper: one fused, batch-gridded pallas_call.
# ---------------------------------------------------------------------------
def regression_conv1d_forward(x, packed_params, *, bblk=None):
    w1b1, w2b2, se1, v2, b_eff = packed_params
    xr = jnp.reshape(x, (-1, L0)).astype(jnp.float32)   # torch: x.reshape(-1, 1, 620)
    B = xr.shape[0]

    # Block heuristic: sublane-dense blocks for large B, but keep >=2 grid steps so both
    # v7x TensorCores get work; tiny B falls back to bblk=1.
    if bblk is None:
        if B >= 256:
            bblk = 32
        elif B >= 32:
            bblk = 16
        elif B >= 16:
            bblk = 8
        else:
            bblk = max(1, B // 2)
    nblk = pl.cdiv(B, bblk)
    b_pad = nblk * bblk
    if b_pad != B:
        xr = jnp.pad(xr, ((0, b_pad - B), (0, 0)))
    x3d = xr.reshape(nblk, bblk, L0)

    const2 = lambda b: (0, 0)
    out = pl.pallas_call(
        fused_kernel,
        out_shape=jax.ShapeDtypeStruct((nblk, bblk, 1), jnp.float32),
        grid=(nblk,),
        in_specs=[
            pl.BlockSpec((1, bblk, L0), lambda b: (b, 0, 0)),
            pl.BlockSpec((C1, 4), const2),
            pl.BlockSpec((C2, 3 * C1 + 1), const2),
            pl.BlockSpec((L0, L1), const2),
            pl.BlockSpec((C2, L1), const2),
            pl.BlockSpec(memory_space=pltpu.MemorySpace.SMEM),   # b_eff scalar
        ],
        out_specs=pl.BlockSpec((1, bblk, 1), lambda b: (b, 0, 0)),
        compiler_params=pltpu.CompilerParams(
            dimension_semantics=("parallel",),
            vmem_limit_bytes=32 * 1024 * 1024),
    )(x3d, w1b1, w2b2, se1, v2, b_eff)
    return out.reshape(b_pad, 1)[:B]


# ---------------------------------------------------------------------------
# Pure-JAX reference (mirrors PyTorch semantics, uses the RAW params) for a correctness check.
# ---------------------------------------------------------------------------
def reference_forward(x, params):
    w1, b1, w2, b2, wfc1, bfc1, wfc2, bfc2 = params
    h = jnp.reshape(x, (-1, 1, L0)).astype(jnp.float32)
    B = h.shape[0]

    def conv1d_same(inp, w, b):
        K = w.shape[-1]
        Lx = inp.shape[-1]
        xp = jnp.pad(inp, ((0, 0), (0, 0), (1, 1)))
        y = jnp.broadcast_to(b[None, :, None], (inp.shape[0], w.shape[0], Lx))
        for k in range(K):
            y = y + jnp.einsum('oi,bil->bol', w[:, :, k], xp[:, :, k:k + Lx],
                               precision=lax.Precision.HIGHEST)
        return y

    def maxpool2(v):
        Bv, Cv, Lv = v.shape
        return v.reshape(Bv, Cv, Lv // 2, 2).max(axis=-1)

    h = maxpool2(conv1d_same(h, w1, b1))
    h = maxpool2(conv1d_same(h, w2, b2))
    h = h.reshape(B, -1)
    h = jnp.dot(h, wfc1.T, precision=lax.Precision.HIGHEST) + bfc1
    return jnp.dot(h, wfc2.T, precision=lax.Precision.HIGHEST) + bfc2


if __name__ == "__main__":
    key = jax.random.PRNGKey(0)
    ks = jax.random.split(key, 9)
    # deterministic synthetic parameters (shapes from the module's __init__)
    w1 = 0.2 * jax.random.normal(ks[0], (C1, 1, 3), jnp.float32)     # conv1.weight
    b1 = 0.1 * jax.random.normal(ks[1], (C1,), jnp.float32)          # conv1.bias
    w2 = 0.05 * jax.random.normal(ks[2], (C2, C1, 3), jnp.float32)   # conv2.weight
    b2 = 0.1 * jax.random.normal(ks[3], (C2,), jnp.float32)          # conv2.bias
    wfc1 = 0.02 * jax.random.normal(ks[4], (H1, FLAT), jnp.float32)  # fc1.weight (see TODO)
    bfc1 = 0.1 * jax.random.normal(ks[5], (H1,), jnp.float32)        # fc1.bias
    wfc2 = 0.1 * jax.random.normal(ks[6], (1, H1), jnp.float32)      # fc2.weight
    bfc2 = 0.1 * jax.random.normal(ks[7], (1,), jnp.float32)         # fc2.bias
    params = (w1, b1, w2, b2, wfc1, bfc1, wfc2, bfc2)

    # pack/collapse parameters ONCE (not per forward call)
    packed = pack_params(params)
    packed = jax.block_until_ready(packed)

    # batch=2, sequence length 620 (forced by forward's reshape(-1, 1, 620))
    x = jax.random.normal(ks[8], (2, L0), jnp.float32)

    out = regression_conv1d_forward(x, packed)
    out = jax.block_until_ready(out)

    ref = reference_forward(x, params)
    np.testing.assert_allclose(np.asarray(out), np.asarray(ref), rtol=1e-2, atol=1e-2)
    assert out.shape == (2, 1)
    print("KERNEL_OK")
</pallas_src>

<mosaic_0001>
module attributes {stable_mosaic.version = 11 : i64} {
  func.func @fused_kernel(%arg0: i32, %arg1: memref<1x1x620xf32, #tpu.memory_space<vmem>>, %arg2: memref<32x4xf32, #tpu.memory_space<vmem>>, %arg3: memref<64x97xf32, #tpu.memory_space<vmem>>, %arg4: memref<620x310xf32, #tpu.memory_space<vmem>>, %arg5: memref<64x310xf32, #tpu.memory_space<vmem>>, %arg6: memref<1x1xf32, #tpu.memory_space<smem>>, %arg7: memref<1x1x1xf32, #tpu.memory_space<vmem>>) attributes {dimension_semantics = [#tpu.dimension_semantics<parallel>], iteration_bounds = array<i64: 2>, scalar_prefetch = 0 : i64, scratch_operands = 0 : i64, tpu.core_type = #tpu.core_type<tc>, window_params = [{transform_indices = @transform_0, window_bounds = array<i64: 1, 1, 620>}, {pipeline_mode = #tpu.pipeline_mode<synchronous>, transform_indices = @transform_1, window_bounds = array<i64: 32, 4>}, {pipeline_mode = #tpu.pipeline_mode<synchronous>, transform_indices = @transform_2, window_bounds = array<i64: 64, 97>}, {pipeline_mode = #tpu.pipeline_mode<synchronous>, transform_indices = @transform_3, window_bounds = array<i64: 620, 310>}, {pipeline_mode = #tpu.pipeline_mode<synchronous>, transform_indices = @transform_4, window_bounds = array<i64: 64, 310>}, {transform_indices = @transform_5, window_bounds = array<i64: 1, 1>}, {transform_indices = @transform_6, window_bounds = array<i64: 1, 1, 1>}]} {
    %c0 = arith.constant 0 : index
    %c0_0 = arith.constant 0 : index
    %0 = vector.load %arg2[%c0, %c0_0] : memref<32x4xf32, #tpu.memory_space<vmem>>, vector<32x4xf32>
    %c0_1 = arith.constant 0 : index
    %c0_2 = arith.constant 0 : index
    %1 = vector.load %arg3[%c0_1, %c0_2] : memref<64x97xf32, #tpu.memory_space<vmem>>, vector<64x96xf32>
    %c0_3 = arith.constant 0 : index
    %c96 = arith.constant 96 : index
    %2 = vector.load %arg3[%c0_3, %c96] : memref<64x97xf32, #tpu.memory_space<vmem>>, vector<64x1xf32>
    %3 = vector.shape_cast %2 : vector<64x1xf32> to vector<1x64x1xf32>
    %c0_4 = arith.constant 0 : index
    %c0_5 = arith.constant 0 : index
    %4 = vector.load %arg4[%c0_4, %c0_5] : memref<620x310xf32, #tpu.memory_space<vmem>>, vector<620x310xf32>
    %c0_6 = arith.constant 0 : index
    %c0_7 = arith.constant 0 : index
    %5 = vector.load %arg5[%c0_6, %c0_7] : memref<64x310xf32, #tpu.memory_space<vmem>>, vector<64x310xf32>
    %c0_8 = arith.constant 0 : index
    %c0_9 = arith.constant 0 : index
    %6 = memref.load %arg6[%c0_8, %c0_9] : memref<1x1xf32, #tpu.memory_space<smem>>
    %c0_10 = arith.constant 0 : index
    %c0_11 = arith.constant 0 : index
    %c0_12 = arith.constant 0 : index
    %7 = vector.load %arg1[%c0_10, %c0_11, %c0_12] : memref<1x1x620xf32, #tpu.memory_space<vmem>>, vector<1x1x620xf32>
    %8 = vector.shape_cast %7 : vector<1x1x620xf32> to vector<1x620xf32>
    %cst = arith.constant 0.000000e+00 : f32
    %9 = vector.broadcast %cst : f32 to vector<1x1xf32>
    %10 = vector.extract_strided_slice %8 {offsets = [0, 0], sizes = [1, 619], strides = [1, 1]} : vector<1x620xf32> to vector<1x619xf32>
    %11 = tpu.concatenate %9, %10 in 1 : vector<1x1xf32>, vector<1x619xf32> -> vector<1x620xf32>
    %12 = vector.shape_cast %11 : vector<1x620xf32> to vector<1x1x620xf32>
    %13 = vector.extract_strided_slice %0 {offsets = [0, 0], sizes = [32, 1], strides = [1, 1]} : vector<32x4xf32> to vector<32x1xf32>
    %14 = vector.shape_cast %13 : vector<32x1xf32> to vector<1x32x1xf32>
    %15 = vector.broadcast %12 : vector<1x1x620xf32> to vector<1x32x620xf32>
    %16 = vector.broadcast %14 : vector<1x32x1xf32> to vector<1x32x620xf32>
    %17 = arith.mulf %15, %16 : vector<1x32x620xf32>
    %18 = vector.shape_cast %8 : vector<1x620xf32> to vector<1x1x620xf32>
    %19 = vector.extract_strided_slice %0 {offsets = [0, 1], sizes = [32, 1], strides = [1, 1]} : vector<32x4xf32> to vector<32x1xf32>
    %20 = vector.shape_cast %19 : vector<32x1xf32> to vector<1x32x1xf32>
    %21 = vector.broadcast %18 : vector<1x1x620xf32> to vector<1x32x620xf32>
    %22 = vector.broadcast %20 : vector<1x32x1xf32> to vector<1x32x620xf32>
    %23 = arith.mulf %21, %22 : vector<1x32x620xf32>
    %24 = arith.addf %17, %23 : vector<1x32x620xf32>
    %25 = vector.extract_strided_slice %8 {offsets = [0, 1], sizes = [1, 619], strides = [1, 1]} : vector<1x620xf32> to vector<1x619xf32>
    %cst_13 = arith.constant 0.000000e+00 : f32
    %26 = vector.broadcast %cst_13 : f32 to vector<1x1xf32>
    %27 = tpu.concatenate %25, %26 in 1 : vector<1x619xf32>, vector<1x1xf32> -> vector<1x620xf32>
    %28 = vector.shape_cast %27 : vector<1x620xf32> to vector<1x1x620xf32>
    %29 = vector.extract_strided_slice %0 {offsets = [0, 2], sizes = [32, 1], strides = [1, 1]} : vector<32x4xf32> to vector<32x1xf32>
    %30 = vector.shape_cast %29 : vector<32x1xf32> to vector<1x32x1xf32>
    %31 = vector.broadcast %28 : vector<1x1x620xf32> to vector<1x32x620xf32>
    %32 = vector.broadcast %30 : vector<1x32x1xf32> to vector<1x32x620xf32>
    %33 = arith.mulf %31, %32 : vector<1x32x620xf32>
    %34 = arith.addf %24, %33 : vector<1x32x620xf32>
    %35 = vector.extract_strided_slice %0 {offsets = [0, 3], sizes = [32, 1], strides = [1, 1]} : vector<32x4xf32> to vector<32x1xf32>
    %36 = vector.shape_cast %35 : vector<32x1xf32> to vector<1x32x1xf32>
    %37 = vector.broadcast %36 : vector<1x32x1xf32> to vector<1x32x620xf32>
    %38 = arith.addf %34, %37 : vector<1x32x620xf32>
    %39 = vector.shape_cast %38 : vector<1x32x620xf32> to vector<32x620xf32>
    %40 = vector.extract_strided_slice %39 {offsets = [0, 1], sizes = [32, 619], strides = [1, 1]} : vector<32x620xf32> to vector<32x619xf32>
    %41 = vector.extract_strided_slice %39 {offsets = [0, 619], sizes = [32, 1], strides = [1, 1]} : vector<32x620xf32> to vector<32x1xf32>
    %42 = tpu.concatenate %40, %41 in 1 : vector<32x619xf32>, vector<32x1xf32> -> vector<32x620xf32>
    %43 = arith.maximumf %39, %42 : vector<32x620xf32>
    %cst_14 = arith.constant dense<0.000000e+00> : vector<32x310xf32>
    %44 = tpu.matmul %43, %4, %cst_14 {dimension_numbers = #tpu.dot_dimension_numbers<[1], [0], [0], [1], [0, 0, 1, 1], [], []>} : vector<32x620xf32>, vector<620x310xf32>, vector<32x310xf32> -> vector<32x310xf32>
    %cst_15 = arith.constant 0.000000e+00 : f32
    %45 = vector.broadcast %cst_15 : f32 to vector<32x1xf32>
    %46 = vector.extract_strided_slice %44 {offsets = [0, 0], sizes = [32, 309], strides = [1, 1]} : vector<32x310xf32> to vector<32x309xf32>
    %47 = tpu.concatenate %45, %46 in 1 : vector<32x1xf32>, vector<32x309xf32> -> vector<32x310xf32>
    %48 = vector.shape_cast %47 : vector<32x310xf32> to vector<1x32x310xf32>
    %49 = vector.shape_cast %44 : vector<32x310xf32> to vector<1x32x310xf32>
    %50 = vector.extract_strided_slice %44 {offsets = [0, 1], sizes = [32, 309], strides = [1, 1]} : vector<32x310xf32> to vector<32x309xf32>
    %cst_16 = arith.constant 0.000000e+00 : f32
    %51 = vector.broadcast %cst_16 : f32 to vector<32x1xf32>
    %52 = tpu.concatenate %50, %51 in 1 : vector<32x309xf32>, vector<32x1xf32> -> vector<32x310xf32>
    %53 = vector.shape_cast %52 : vector<32x310xf32> to vector<1x32x310xf32>
    %54 = tpu.concatenate %48, %49, %53 in 1 : vector<1x32x310xf32>, vector<1x32x310xf32>, vector<1x32x310xf32> -> vector<1x96x310xf32>
    %55 = vector.shape_cast %1 : vector<64x96xf32> to vector<1x64x96xf32>
    %cst_17 = arith.constant dense<0.000000e+00> : vector<1x64x310xf32>
    %56 = tpu.matmul %55, %54, %cst_17 {dimension_numbers = #tpu.dot_dimension_numbers<[2], [1], [1], [2], [0, 0, 0, 1, 1, 2], [0], [0]>} : vector<1x64x96xf32>, vector<1x96x310xf32>, vector<1x64x310xf32> -> vector<1x64x310xf32>
    %57 = vector.broadcast %3 : vector<1x64x1xf32> to vector<1x64x310xf32>
    %58 = arith.addf %56, %57 : vector<1x64x310xf32>
    %59 = vector.shape_cast %58 : vector<1x64x310xf32> to vector<64x310xf32>
    %60 = vector.extract_strided_slice %59 {offsets = [0, 1], sizes = [64, 309], strides = [1, 1]} : vector<64x310xf32> to vector<64x309xf32>
    %61 = vector.extract_strided_slice %59 {offsets = [0, 309], sizes = [64, 1], strides = [1, 1]} : vector<64x310xf32> to vector<64x1xf32>
    %62 = tpu.concatenate %60, %61 in 1 : vector<64x309xf32>, vector<64x1xf32> -> vector<64x310xf32>
    %63 = arith.maximumf %59, %62 : vector<64x310xf32>
    %64 = vector.shape_cast %63 : vector<64x310xf32> to vector<1x64x310xf32>
    %65 = vector.shape_cast %5 : vector<64x310xf32> to vector<1x64x310xf32>
    %66 = arith.mulf %64, %65 : vector<1x64x310xf32>
    %cst_18 = arith.constant dense<0.000000e+00> : vector<1x64xf32>
    %67 = vector.multi_reduction <add>, %66, %cst_18 [2] : vector<1x64x310xf32> to vector<1x64xf32>
    %68 = vector.shape_cast %67 : vector<1x64xf32> to vector<1x64x1xf32>
    %cst_19 = arith.constant dense<0.000000e+00> : vector<1x1xf32>
    %69 = vector.multi_reduction <add>, %68, %cst_19 [1] : vector<1x64x1xf32> to vector<1x1xf32>
    %70 = vector.broadcast %6 : f32 to vector<1x1xf32>
    %71 = arith.addf %69, %70 : vector<1x1xf32>
    %c0_20 = arith.constant 0 : index
    %c0_21 = arith.constant 0 : index
    %c0_22 = arith.constant 0 : index
    %72 = vector.load %arg7[%c0_20, %c0_21, %c0_22] : memref<1x1x1xf32, #tpu.memory_space<vmem>>, vector<1x1x1xf32>
    %73 = vector.shape_cast %72 : vector<1x1x1xf32> to vector<1x1xf32>
    %74 = vector.shape_cast %71 : vector<1x1xf32> to vector<1x1x1xf32>
    tpu.vector_store %arg7[%c0_20, %c0_21, %c0_22], %74 {strides = array<i32>} : memref<1x1x1xf32, #tpu.memory_space<vmem>>, vector<1x1x1xf32>,
    return
  }
  func.func @transform_0(%arg0: i32) -> (i32, i32, i32) {
    %c0_i32 = arith.constant 0 : i32
    %c0_i32_0 = arith.constant 0 : i32
    %c0_i32_1 = arith.constant 0 : i32
    return %arg0, %c0_i32, %c0_i32_0 : i32, i32, i32
  }
  func.func @transform_1(%arg0: i32) -> (i32, i32) {
    %c0_i32 = arith.constant 0 : i32
    %c0_i32_0 = arith.constant 0 : i32
    %c0_i32_1 = arith.constant 0 : i32
    return %c0_i32, %c0_i32_0 : i32, i32
  }
  func.func @transform_2(%arg0: i32) -> (i32, i32) {
    %c0_i32 = arith.constant 0 : i32
    %c0_i32_0 = arith.constant 0 : i32
    %c0_i32_1 = arith.constant 0 : i32
    return %c0_i32, %c0_i32_0 : i32, i32
  }
  func.func @transform_3(%arg0: i32) -> (i32, i32) {
    %c0_i32 = arith.constant 0 : i32
    %c0_i32_0 = arith.constant 0 : i32
    %c0_i32_1 = arith.constant 0 : i32
    return %c0_i32, %c0_i32_0 : i32, i32
  }
  func.func @transform_4(%arg0: i32) -> (i32, i32) {
    %c0_i32 = arith.constant 0 : i32
    %c0_i32_0 = arith.constant 0 : i32
    %c0_i32_1 = arith.constant 0 : i32
    return %c0_i32, %c0_i32_0 : i32, i32
  }
  func.func @transform_5(%arg0: i32) -> (i32, i32) {
    %c0_i32 = arith.constant 0 : i32
    %c0_i32_0 = arith.constant 0 : i32
    %c0_i32_1 = arith.constant 0 : i32
    return %c0_i32, %c0_i32_0 : i32, i32
  }
  func.func @transform_6(%arg0: i32) -> (i32, i32, i32) {
    %c0_i32 = arith.constant 0 : i32
    %c0_i32_0 = arith.constant 0 : i32
    %c0_i32_1 = arith.constant 0 : i32
    return %arg0, %c0_i32, %c0_i32_0 : i32, i32, i32
  }
}

</mosaic_0001>

<llo_original>
// kernel: tpu_custom_call.1
$region0: #{tpu_custom_call.1}
  #allocation0 [shape = 'u32[]', space=smem, size = 0x4, offset = 0x4, fixed_abs, tag = 'smem constant byte address 0x4 - core index']
  #allocation1 [shape = 'u32[144,128]{1,0:T(1,128)}', space=vmem, size = 0x12000, scoped, tag = 'internal scratch']
  #allocation2 [shape = 'f32[1,1]{1,0:T(1,128)S(6)}', space=smem, size = 0x200, scoped, tag = 'scoped memory for tpu_custom_call.1']
  %s0 = inlined_call_operand.vmem [shape: f32[2,1,620], index: 0, kind: input, shape index: {}]
  %s1 = inlined_call_operand.vmem [shape: f32[32,4], index: 1, kind: input, shape index: {}]
  %s2 = inlined_call_operand.vmem [shape: f32[64,97], index: 2, kind: input, shape index: {}]
  %s3 = inlined_call_operand.vmem [shape: f32[620,310], index: 3, kind: input, shape index: {}]
  %s4 = inlined_call_operand.vmem [shape: f32[64,310], index: 4, kind: input, shape index: {}]
  %s5 = inlined_call_operand.<no memory space> [shape: f32[1,1], index: 5, kind: input, shape index: {}]
  %s6 = inlined_call_operand.vmem [shape: f32[2,1,1], index: 6, kind: output, shape index: {}]
  %s7 = sld [smem:[#allocation0]]
  $region57: #{tpu_custom_call.1} parent=0
    _
  %s9 = ssub.s32 1, %s7
  %s10 = scalar_select 0, %s9, %s7
  %11 = sst [smem:[#allocation2]] %s5
  loop: start=0, step=1, limit=4
  $region2: #{tpu_custom_call.1} parent=0 // loop_pre_header
    _
  $region3: #{tpu_custom_call.1} parent=0 // loop_header
    %s13 = sphi 0, %s17
    %p14 = scmp.ge.s32.totalorder %s13, 4
    %s23 = sphi 0, %s25
    %s26 = sphi 0, %s23
    %s27 = sphi 0, %s26
    %s43 = sphi 0, %s27
    %s47 = sphi 0, %s47
    %s49 = sphi 0, %s47
    %s50 = sphi 0, %s49
    %s64 = sphi 0, %s50
    %s68 = sphi 0, %s68
    %s70 = sphi 0, %s68
    %s71 = sphi 0, %s70
    %s85 = sphi 0, %s71
    %s89 = sphi 0, %s89
    %s91 = sphi 0, %s89
    %s92 = sphi 0, %s91
    %s106 = sphi 0, %s92
    %s110 = sphi 0, %s110
    %s112 = sphi 0, %s110
    %s113 = sphi 0, %s112
    %s127 = sphi 0, %s113
    %s131 = sphi 0, %s131
    %s133 = sphi 0, %s131
    %s134 = sphi 0, %s133
    %s148 = sphi 0, %s134
    %s154 = sphi 0, %s156
    %s157 = sphi 0, %s154
    %s158 = sphi 0, %s157
    %s174 = sphi 0, %s158
  $region4: #{tpu_custom_call.1} parent=0 // loop_header_branch
    %16 = sbr.rel (%p14) target = $region8
  $region5: #{tpu_custom_call.1} parent=0 // loop_body
    %s18 = ssub.s32 %s13, 1
    %s19 = ssub.s32 %s13, 2
    %s20 = sadd.s32 %s13, 1
    %s21 = ssub.s32 %s13, %s20
    %p22 = scmp.eq.s32.totalorder %s21, 0
    %s24 = sadd.s32 %s23, 1
    %s25 = scalar_select %p22, %s23, %s24
    %p28 = pneg %p22
    %p29 = scmp.eq.s32.totalorder %s13, 1
    %p30 = por %p28, %p29
    %p31 = scmp.ne.s32.totalorder %s23, %s26
    %p32 = scmp.eq.s32.totalorder %s13, 0
    %p33 = por %p31, %p32
    %p34 = scmp.ne.s32.totalorder %s23, %s26
    %p35 = scmp.eq.s32.totalorder %s18, 1
    %p36 = por %p34, %p35
    %p37 = scmp.ne.s32.totalorder %s26, %s27
    %p38 = scmp.eq.s32.totalorder %s18, 0
    %p39 = por %p37, %p38
    %p40 = scmp.ne.s32.totalorder %s26, %s27
    %p41 = scmp.eq.s32.totalorder %s19, 1
    %p42 = por %p40, %p41
    %p44 = scmp.ne.s32.totalorder %s27, %s43
    %p45 = scmp.eq.s32.totalorder %s19, 0
    %p46 = por %p44, %p45
    %s48 = sadd.s32 %s47, 1
    %p51 = scmp.eq.s32.totalorder %s13, 1
    %p52 = scmp.ne.s32.totalorder %s47, %s49
    %p53 = scmp.eq.s32.totalorder %s13, 0
    %p54 = por %p52, %p53
    %p55 = scmp.ne.s32.totalorder %s47, %s49
    %p56 = scmp.eq.s32.totalorder %s18, 1
    %p57 = por %p55, %p56
    %p58 = scmp.ne.s32.totalorder %s49, %s50
    %p59 = scmp.eq.s32.totalorder %s18, 0
    %p60 = por %p58, %p59
    %p61 = scmp.ne.s32.totalorder %s49, %s50
    %p62 = scmp.eq.s32.totalorder %s19, 1
    %p63 = por %p61, %p62
    %p65 = scmp.ne.s32.totalorder %s50, %s64
    %p66 = scmp.eq.s32.totalorder %s19, 0
    %p67 = por %p65, %p66
    %s69 = sadd.s32 %s68, 1
    %p72 = scmp.eq.s32.totalorder %s13, 1
    %p73 = scmp.ne.s32.totalorder %s68, %s70
    %p74 = scmp.eq.s32.totalorder %s13, 0
    %p75 = por %p73, %p74
    %p76 = scmp.ne.s32.totalorder %s68, %s70
    %p77 = scmp.eq.s32.totalorder %s18, 1
    %p78 = por %p76, %p77
    %p79 = scmp.ne.s32.totalorder %s70, %s71
    %p80 = scmp.eq.s32.totalorder %s18, 0
    %p81 = por %p79, %p80
    %p82 = scmp.ne.s32.totalorder %s70, %s71
    %p83 = scmp.eq.s32.totalorder %s19, 1
    %p84 = por %p82, %p83
    %p86 = scmp.ne.s32.totalorder %s71, %s85
    %p87 = scmp.eq.s32.totalorder %s19, 0
    %p88 = por %p86, %p87
    %s90 = sadd.s32 %s89, 1
    %p93 = scmp.eq.s32.totalorder %s13, 1
    %p94 = scmp.ne.s32.totalorder %s89, %s91
    %p95 = scmp.eq.s32.totalorder %s13, 0
    %p96 = por %p94, %p95
    %p97 = scmp.ne.s32.totalorder %s89, %s91
    %p98 = scmp.eq.s32.totalorder %s18, 1
    %p99 = por %p97, %p98
    %p100 = scmp.ne.s32.totalorder %s91, %s92
    %p101 = scmp.eq.s32.totalorder %s18, 0
    %p102 = por %p100, %p101
    %p103 = scmp.ne.s32.totalorder %s91, %s92
    %p104 = scmp.eq.s32.totalorder %s19, 1
    %p105 = por %p103, %p104
    %p107 = scmp.ne.s32.totalorder %s92, %s106
    %p108 = scmp.eq.s32.totalorder %s19, 0
    %p109 = por %p107, %p108
    %s111 = sadd.s32 %s110, 1
    %p114 = scmp.eq.s32.totalorder %s13, 1
    %p115 = scmp.ne.s32.totalorder %s110, %s112
    %p116 = scmp.eq.s32.totalorder %s13, 0
    %p117 = por %p115, %p116
    %p118 = scmp.ne.s32.totalorder %s110, %s112
    %p119 = scmp.eq.s32.totalorder %s18, 1
    %p120 = por %p118, %p119
    %p121 = scmp.ne.s32.totalorder %s112, %s113
    %p122 = scmp.eq.s32.totalorder %s18, 0
    %p123 = por %p121, %p122
    %p124 = scmp.ne.s32.totalorder %s112, %s113
    %p125 = scmp.eq.s32.totalorder %s19, 1
    %p126 = por %p124, %p125
    %p128 = scmp.ne.s32.totalorder %s113, %s127
    %p129 = scmp.eq.s32.totalorder %s19, 0
    %p130 = por %p128, %p129
    %s132 = sadd.s32 %s131, 1
    %p135 = scmp.eq.s32.totalorder %s13, 1
    %p136 = scmp.ne.s32.totalorder %s131, %s133
    %p137 = scmp.eq.s32.totalorder %s13, 0
    %p138 = por %p136, %p137
    %p139 = scmp.ne.s32.totalorder %s131, %s133
    %p140 = scmp.eq.s32.totalorder %s18, 1
    %p141 = por %p139, %p140
    %p142 = scmp.ne.s32.totalorder %s133, %s134
    %p143 = scmp.eq.s32.totalorder %s18, 0
    %p144 = por %p142, %p143
    %p145 = scmp.ne.s32.totalorder %s133, %s134
    %p146 = scmp.eq.s32.totalorder %s19, 1
    %p147 = por %p145, %p146
    %p149 = scmp.ne.s32.totalorder %s134, %s148
    %p150 = scmp.eq.s32.totalorder %s19, 0
    %p151 = por %p149, %p150
    %s152 = ssub.s32 %s13, %s20
    %p153 = scmp.eq.s32.totalorder %s152, 0
    %s155 = sadd.s32 %s154, 1
    %s156 = scalar_select %p153, %s154, %s155
    %p159 = pneg %p153
    %p160 = scmp.eq.s32.totalorder %s13, 1
    %p161 = por %p159, %p160
    %p162 = scmp.ne.s32.totalorder %s154, %s157
    %p163 = scmp.eq.s32.totalorder %s13, 0
    %p164 = por %p162, %p163
    %p165 = scmp.ne.s32.totalorder %s154, %s157
    %p166 = scmp.eq.s32.totalorder %s18, 1
    %p167 = por %p165, %p166
    %p168 = scmp.ne.s32.totalorder %s157, %s158
    %p169 = scmp.eq.s32.totalorder %s18, 0
    %p170 = por %p168, %p169
    %p171 = scmp.ne.s32.totalorder %s157, %s158
    %p172 = scmp.eq.s32.totalorder %s19, 1
    %p173 = por %p171, %p172
    %p175 = scmp.ne.s32.totalorder %s158, %s174
    %p176 = scmp.eq.s32.totalorder %s19, 0
    %p177 = por %p175, %p176
    %p178 = scmp.le.s32.totalorder 1, %s13
    %p179 = scmp.lt.s32.totalorder %s13, 3
    %p180 = pnand %p178, %p179
    %p181 = pneg %p180
    // Predicated region
    $region9: #{tpu_custom_call.1} parent=5 // pred_check
      _
    $region10: #{tpu_custom_call.1} parent=5 // pred_check_branch
      %183 = sbr.rel (%p180) target = $region12
    $region11: #{tpu_custom_call.1} parent=5 // pred_region
      %s184 = ssub.s32 %s13, 1
      // Predicated region
      $region13: #{tpu_custom_call.1} parent=11 // pred_check
        %p185 = pneg %p60
      $region14: #{tpu_custom_call.1} parent=11 // pred_check_branch
        %187 = sbr.rel (%p185) target = $region16
      $region15: #{tpu_custom_call.1} parent=11 // pred_region
        _
      $region16: #{tpu_custom_call.1} parent=11 // pred_fallthru
        _
      // Predicated region
      $region17: #{tpu_custom_call.1} parent=11 // pred_check
        %p188 = pneg %p81
      $region18: #{tpu_custom_call.1} parent=11 // pred_check_branch
        %190 = sbr.rel (%p188) target = $region20
      $region19: #{tpu_custom_call.1} parent=11 // pred_region
        _
      $region20: #{tpu_custom_call.1} parent=11 // pred_fallthru
        _
      // Predicated region
      $region21: #{tpu_custom_call.1} parent=11 // pred_check
        %p191 = pneg %p102
      $region22: #{tpu_custom_call.1} parent=11 // pred_check_branch
        %193 = sbr.rel (%p191) target = $region24
      $region23: #{tpu_custom_call.1} parent=11 // pred_region
        _
      $region24: #{tpu_custom_call.1} parent=11 // pred_fallthru
        _
      // Predicated region
      $region25: #{tpu_custom_call.1} parent=11 // pred_check
        %p194 = pneg %p123
      $region26: #{tpu_custom_call.1} parent=11 // pred_check_branch
        %196 = sbr.rel (%p194) target = $region28
      $region27: #{tpu_custom_call.1} parent=11 // pred_region
        _
      $region28: #{tpu_custom_call.1} parent=11 // pred_fallthru
        _
      // Predicated region
      $region29: #{tpu_custom_call.1} parent=11 // pred_check
        %p197 = pneg %p144
      $region30: #{tpu_custom_call.1} parent=11 // pred_check_branch
        %199 = sbr.rel (%p197) target = $region32
      $region31: #{tpu_custom_call.1} parent=11 // pred_region
        _
      $region32: #{tpu_custom_call.1} parent=11 // pred_fallthru
        _
    $region12: #{tpu_custom_call.1} parent=5 // pred_fallthru
      _
    %p200 = scmp.lt.s32.totalorder %s13, 2
    // Predicated region
    $region33: #{tpu_custom_call.1} parent=5 // pred_check
      %p201 = pneg %p200
    $region34: #{tpu_custom_call.1} parent=5 // pred_check_branch
      %203 = sbr.rel (%p201) target = $region36
    $region35: #{tpu_custom_call.1} parent=5 // pred_region
      // Predicated region
      $region37: #{tpu_custom_call.1} parent=35 // pred_check
        %p204 = pneg %p33
      $region38: #{tpu_custom_call.1} parent=35 // pred_check_branch
        %206 = sbr.rel (%p204) target = $region40
      $region39: #{tpu_custom_call.1} parent=35 // pred_region
        %p207 = scmp.lt.s32.totalorder %s13, 1
        %s208 = scalar_select %p207, %s13, 1
        %s209 = smul.addr %s208, 5
        %s210 = scalar_lea.vmem %s0, %s209
      $region40: #{tpu_custom_call.1} parent=35 // pred_fallthru
        _
    $region36: #{tpu_custom_call.1} parent=5 // pred_fallthru
      _
    %p211 = scmp.le.s32.totalorder 1, %s13
    %p212 = scmp.lt.s32.totalorder %s13, 3
    %p213 = pnand %p211, %p212
    %p214 = pneg %p213
    // Predicated region
    $region41: #{tpu_custom_call.1} parent=5 // pred_check
      _
    $region42: #{tpu_custom_call.1} parent=5 // pred_check_branch
      %216 = sbr.rel (%p213) target = $region44
    $region43: #{tpu_custom_call.1} parent=5 // pred_region
      %s217 = ssub.s32 %s13, 1
      %p218 = scmp.lt.s32.totalorder %s18, 1
      %s219 = scalar_select %p218, %s18, 1
      %s220 = smul.addr %s219, 5
      %s221 = scalar_lea.vmem %s0, %s220
      %p222 = pneg %p39
      %p223 = pneg %p36
      %p224 = pneg %p60
      %p225 = pneg %p57
      %p226 = pneg %p81
      %p227 = pneg %p78
      %p228 = pneg %p102
      %p229 = pneg %p99
      %p230 = pneg %p123
      %p231 = pneg %p120
      %p232 = pneg %p144
      %p233 = pneg %p141
      %p234 = pneg %p170
      %p235 = pneg %p167
      %p236 = scmp.lt.s32.totalorder %s18, 1
      %s237 = scalar_select %p236, %s18, 1
      %s238 = scalar_lea.vmem %s6, %s237
      %p239 = scmp.lt.s32.totalorder %s18, 1
      %s240 = scalar_select %p239, %s18, 1
      %s241 = smul.addr %s240, 5
      %s242 = scalar_lea.vmem %s0, %s241
      %p243 = scmp.lt.s32.totalorder %s18, 1
      %s244 = scalar_select %p243, %s18, 1
      %s245 = scalar_lea.vmem %s6, %s244
      %v246 = vld [vmem:[%s1] sm:$0xff]
      %v247 = vld [vmem:[%s1 + $0x8] sm:$0xff]
      %v248 = vld [vmem:[%s1 + $0x10] sm:$0xff]
      %v249 = vld [vmem:[%s1 + $0x18] sm:$0xff]
      %v250 = vld [vmem:[%s2] sm:$0xff]
      %v251 = vld [vmem:[%s2 + $0x8] sm:$0xff]
      %v252 = vld [vmem:[%s2 + $0x10] sm:$0xff]
      %v253 = vld [vmem:[%s2 + $0x18] sm:$0xff]
      %v254 = vld [vmem:[%s2 + $0x20] sm:$0xff]
      %v255 = vld [vmem:[%s2 + $0x28] sm:$0xff]
      %v256 = vld [vmem:[%s2 + $0x30] sm:$0xff]
      %v257 = vld [vmem:[%s2 + $0x38] sm:$0xff]
      %v258 = vld [vmem:[%s3] sm:$0xff]
      %v259 = vld [vmem:[%s3 + $0x8] sm:$0xff]
      %v260 = vld [vmem:[%s3 + $0x10] sm:$0xff]
      %v261 = vld [vmem:[%s3 + $0x18] sm:$0xff]
      %v262 = vld [vmem:[%s3 + $0x20] sm:$0xff]
      %v263 = vld [vmem:[%s3 + $0x28] sm:$0xff]
      %v264 = vld [vmem:[%s3 + $0x30] sm:$0xff]
      %v265 = vld [vmem:[%s3 + $0x38] sm:$0xff]
      %v266 = vld [vmem:[%s3 + $0x40] sm:$0xff]
      %v267 = vld [vmem:[%s3 + $0x48] sm:$0xff]
      %v268 = vld [vmem:[%s3 + $0x50] sm:$0xff]
      %v269 = vld [vmem:[%s3 + $0x58] sm:$0xff]
      %v270 = vld [vmem:[%s3 + $0x60] sm:$0xff]
      %v271 = vld [vmem:[%s3 + $0x68] sm:$0xff]
      %v272 = vld [vmem:[%s3 + $0x70] sm:$0xff]
      %v273 = vld [vmem:[%s3 + $0x78] sm:$0xff]
      %v274 = vld [vmem:[%s3 + $0x80] sm:$0xff]
      %v275 = vld [vmem:[%s3 + $0x88] sm:$0xff]
      %v276 = vld [vmem:[%s3 + $0x90] sm:$0xff]
      %v277 = vld [vmem:[%s3 + $0x98] sm:$0xff]
      %v278 = vld [vmem:[%s3 + $0xa0] sm:$0xff]
      %v279 = vld [vmem:[%s3 + $0xa8] sm:$0xff]
      %v280 = vld [vmem:[%s3 + $0xb0] sm:$0xff]
      %v281 = vld [vmem:[%s3 + $0xb8] sm:$0xff]
      %v282 = vld [vmem:[%s3 + $0xc0] sm:$0xff]
      %v283 = vld [vmem:[%s3 + $0xc8] sm:$0xff]
      %v284 = vld [vmem:[%s3 + $0xd0] sm:$0xff]
      %v285 = vld [vmem:[%s3 + $0xd8] sm:$0xff]
      %v286 = vld [vmem:[%s3 + $0xe0] sm:$0xff]
      %v287 = vld [vmem:[%s3 + $0xe8] sm:$0xff]
      %v288 = vld [vmem:[%s3 + $0xf0] sm:$0xff]
      %v289 = vld [vmem:[%s3 + $0xf8] sm:$0xff]
      %v290 = vld [vmem:[%s3 + $0x100] sm:$0xff]
      %v291 = vld [vmem:[%s3 + $0x108] sm:$0xff]
      %v292 = vld [vmem:[%s3 + $0x110] sm:$0xff]
      %v293 = vld [vmem:[%s3 + $0x118] sm:$0xff]
      %v294 = vld [vmem:[%s3 + $0x120] sm:$0xff]
      %v295 = vld [vmem:[%s3 + $0x128] sm:$0xff]
      %v296 = vld [vmem:[%s3 + $0x130] sm:$0xff]
      %v297 = vld [vmem:[%s3 + $0x138] sm:$0xff]
      %v298 = vld [vmem:[%s3 + $0x140] sm:$0xff]
      %v299 = vld [vmem:[%s3 + $0x148] sm:$0xff]
      %v300 = vld [vmem:[%s3 + $0x150] sm:$0xff]
      %v301 = vld [vmem:[%s3 + $0x158] sm:$0xff]
      %v302 = vld [vmem:[%s3 + $0x160] sm:$0xff]
      %v303 = vld [vmem:[%s3 + $0x168] sm:$0xff]
      %v304 = vld [vmem:[%s3 + $0x170] sm:$0xff]
      %v305 = vld [vmem:[%s3 + $0x178] sm:$0xff]
      %v306 = vld [vmem:[%s3 + $0x180] sm:$0xff]
      %v307 = vld [vmem:[%s3 + $0x188] sm:$0xff]
      %v308 = vld [vmem:[%s3 + $0x190] sm:$0xff]
      %v309 = vld [vmem:[%s3 + $0x198] sm:$0xff]
      %v310 = vld [vmem:[%s3 + $0x1a0] sm:$0xff]
      %v311 = vld [vmem:[%s3 + $0x1a8] sm:$0xff]
      %v312 = vld [vmem:[%s3 + $0x1b0] sm:$0xff]
      %v313 = vld [vmem:[%s3 + $0x1b8] sm:$0xff]
      %v314 = vld [vmem:[%s3 + $0x1c0] sm:$0xff]
      %v315 = vld [vmem:[%s3 + $0x1c8] sm:$0xff]
      %v316 = vld [vmem:[%s3 + $0x1d0] sm:$0xff]
      %v317 = vld [vmem:[%s3 + $0x1d8] sm:$0xff]
      %v318 = vld [vmem:[%s3 + $0x1e0] sm:$0xff]
      %v319 = vld [vmem:[%s3 + $0x1e8] sm:$0xff]
      %v320 = vld [vmem:[%s3 + $0x1f0] sm:$0xff]
      %v321 = vld [vmem:[%s3 + $0x1f8] sm:$0xff]
      %v322 = vld [vmem:[%s3 + $0x200] sm:$0xff]
      %v323 = vld [vmem:[%s3 + $0x208] sm:$0xff]
      %v324 = vld [vmem:[%s3 + $0x210] sm:$0xff]
      %v325 = vld [vmem:[%s3 + $0x218] sm:$0xff]
      %v326 = vld [vmem:[%s3 + $0x220] sm:$0xff]
      %v327 = vld [vmem:[%s3 + $0x228] sm:$0xff]
      %v328 = vld [vmem:[%s3 + $0x230] sm:$0xff]
      %v329 = vld [vmem:[%s3 + $0x238] sm:$0xff]
      %v330 = vld [vmem:[%s3 + $0x240] sm:$0xff]
      %v331 = vld [vmem:[%s3 + $0x248] sm:$0xff]
      %v332 = vld [vmem:[%s3 + $0x250] sm:$0xff]
      %v333 = vld [vmem:[%s3 + $0x258] sm:$0xff]
      %v334 = vld [vmem:[%s3 + $0x260] sm:$0xff]
      %v335 = vld [vmem:[%s3 + $0x268] sm:$0xff]
      %v336 = vld [vmem:[%s3 + $0x270] sm:$0xff]
      %v337 = vld [vmem:[%s3 + $0x278] sm:$0xff]
      %v338 = vld [vmem:[%s3 + $0x280] sm:$0xff]
      %v339 = vld [vmem:[%s3 + $0x288] sm:$0xff]
      %v340 = vld [vmem:[%s3 + $0x290] sm:$0xff]
      %v341 = vld [vmem:[%s3 + $0x298] sm:$0xff]
      %v342 = vld [vmem:[%s3 + $0x2a0] sm:$0xff]
      %v343 = vld [vmem:[%s3 + $0x2a8] sm:$0xff]
      %v344 = vld [vmem:[%s3 + $0x2b0] sm:$0xff]
      %v345 = vld [vmem:[%s3 + $0x2b8] sm:$0xff]
      %v346 = vld [vmem:[%s3 + $0x2c0] sm:$0xff]
      %v347 = vld [vmem:[%s3 + $0x2c8] sm:$0xff]
      %v348 = vld [vmem:[%s3 + $0x2d0] sm:$0xff]
      %v349 = vld [vmem:[%s3 + $0x2d8] sm:$0xff]
      %v350 = vld [vmem:[%s3 + $0x2e0] sm:$0xff]
      %v351 = vld [vmem:[%s3 + $0x2e8] sm:$0xff]
      %v352 = vld [vmem:[%s3 + $0x2f0] sm:$0xff]
      %v353 = vld [vmem:[%s3 + $0x2f8] sm:$0xff]
      %v354 = vld [vmem:[%s3 + $0x300] sm:$0xff]
      %v355 = vld [vmem:[%s3 + $0x308] sm:$0xff]
      %v356 = vld [vmem:[%s3 + $0x310] sm:$0xff]
      %v357 = vld [vmem:[%s3 + $0x318] sm:$0xff]
      %v358 = vld [vmem:[%s3 + $0x320] sm:$0xff]
      %v359 = vld [vmem:[%s3 + $0x328] sm:$0xff]
      %v360 = vld [vmem:[%s3 + $0x330] sm:$0xff]
      %v361 = vld [vmem:[%s3 + $0x338] sm:$0xff]
      %v362 = vld [vmem:[%s3 + $0x340] sm:$0xff]
      %v363 = vld [vmem:[%s3 + $0x348] sm:$0xff]
      %v364 = vld [vmem:[%s3 + $0x350] sm:$0xff]
      %v365 = vld [vmem:[%s3 + $0x358] sm:$0xff]
      %v366 = vld [vmem:[%s3 + $0x360] sm:$0xff]
      %v367 = vld [vmem:[%s3 + $0x368] sm:$0xff]
      %v368 = vld [vmem:[%s3 + $0x370] sm:$0xff]
      %v369 = vld [vmem:[%s3 + $0x378] sm:$0xff]
      %v370 = vld [vmem:[%s3 + $0x380] sm:$0xff]
      %v371 = vld [vmem:[%s3 + $0x388] sm:$0xff]
      %v372 = vld [vmem:[%s3 + $0x390] sm:$0xff]
      %v373 = vld [vmem:[%s3 + $0x398] sm:$0xff]
      %v374 = vld [vmem:[%s3 + $0x3a0] sm:$0xff]
      %v375 = vld [vmem:[%s3 + $0x3a8] sm:$0xff]
      %v376 = vld [vmem:[%s3 + $0x3b0] sm:$0xff]
      %v377 = vld [vmem:[%s3 + $0x3b8] sm:$0xff]
      %v378 = vld [vmem:[%s3 + $0x3c0] sm:$0xff]
      %v379 = vld [vmem:[%s3 + $0x3c8] sm:$0xff]
      %v380 = vld [vmem:[%s3 + $0x3d0] sm:$0xff]
      %v381 = vld [vmem:[%s3 + $0x3d8] sm:$0xff]
      %v382 = vld [vmem:[%s3 + $0x3e0] sm:$0xff]
      %v383 = vld [vmem:[%s3 + $0x3e8] sm:$0xff]
      %v384 = vld [vmem:[%s3 + $0x3f0] sm:$0xff]
      %v385 = vld [vmem:[%s3 + $0x3f8] sm:$0xff]
      %v386 = vld [vmem:[%s3 + $0x400] sm:$0xff]
      %v387 = vld [vmem:[%s3 + $0x408] sm:$0xff]
      %v388 = vld [vmem:[%s3 + $0x410] sm:$0xff]
      %v389 = vld [vmem:[%s3 + $0x418] sm:$0xff]
      %v390 = vld [vmem:[%s3 + $0x420] sm:$0xff]
      %v391 = vld [vmem:[%s3 + $0x428] sm:$0xff]
      %v392 = vld [vmem:[%s3 + $0x430] sm:$0xff]
      %v393 = vld [vmem:[%s3 + $0x438] sm:$0xff]
      %v394 = vld [vmem:[%s3 + $0x440] sm:$0xff]
      %v395 = vld [vmem:[%s3 + $0x448] sm:$0xff]
      %v396 = vld [vmem:[%s3 + $0x450] sm:$0xff]
      %v397 = vld [vmem:[%s3 + $0x458] sm:$0xff]
      %v398 = vld [vmem:[%s3 + $0x460] sm:$0xff]
      %v399 = vld [vmem:[%s3 + $0x468] sm:$0xff]
      %v400 = vld [vmem:[%s3 + $0x470] sm:$0xff]
      %v401 = vld [vmem:[%s3 + $0x478] sm:$0xff]
      %v402 = vld [vmem:[%s3 + $0x480] sm:$0xff]
      %v403 = vld [vmem:[%s3 + $0x488] sm:$0xff]
      %v404 = vld [vmem:[%s3 + $0x490] sm:$0xff]
      %v405 = vld [vmem:[%s3 + $0x498] sm:$0xff]
      %v406 = vld [vmem:[%s3 + $0x4a0] sm:$0xff]
      %v407 = vld [vmem:[%s3 + $0x4a8] sm:$0xff]
      %v408 = vld [vmem:[%s3 + $0x4b0] sm:$0xff]
      %v409 = vld [vmem:[%s3 + $0x4b8] sm:$0xff]
      %v410 = vld [vmem:[%s3 + $0x4c0] sm:$0xff]
      %v411 = vld [vmem:[%s3 + $0x4c8] sm:$0xff]
      %v412 = vld [vmem:[%s3 + $0x4d0] sm:$0xff]
      %v413 = vld [vmem:[%s3 + $0x4d8] sm:$0xff]
      %v414 = vld [vmem:[%s3 + $0x4e0] sm:$0xff]
      %v415 = vld [vmem:[%s3 + $0x4e8] sm:$0xff]
      %v416 = vld [vmem:[%s3 + $0x4f0] sm:$0xff]
      %v417 = vld [vmem:[%s3 + $0x4f8] sm:$0xff]
      %v418 = vld [vmem:[%s3 + $0x500] sm:$0xff]
      %v419 = vld [vmem:[%s3 + $0x508] sm:$0xff]
      %v420 = vld [vmem:[%s3 + $0x510] sm:$0xff]
      %v421 = vld [vmem:[%s3 + $0x518] sm:$0xff]
      %v422 = vld [vmem:[%s3 + $0x520] sm:$0xff]
      %v423 = vld [vmem:[%s3 + $0x528] sm:$0xff]
      %v424 = vld [vmem:[%s3 + $0x530] sm:$0xff]
      %v425 = vld [vmem:[%s3 + $0x538] sm:$0xff]
      %v426 = vld [vmem:[%s3 + $0x540] sm:$0xff]
      %v427 = vld [vmem:[%s3 + $0x548] sm:$0xff]
      %v428 = vld [vmem:[%s3 + $0x550] sm:$0xff]
      %v429 = vld [vmem:[%s3 + $0x558] sm:$0xff]
      %v430 = vld [vmem:[%s3 + $0x560] sm:$0xff]
      %v431 = vld [vmem:[%s3 + $0x568] sm:$0xff]
      %v432 = vld [vmem:[%s3 + $0x570] sm:$0xff]
      %v433 = vld [vmem:[%s3 + $0x578] sm:$0xff]
      %v434 = vld [vmem:[%s3 + $0x580] sm:$0xff]
      %v435 = vld [vmem:[%s3 + $0x588] sm:$0xff]
      %v436 = vld [vmem:[%s3 + $0x590] sm:$0xff]
      %v437 = vld [vmem:[%s3 + $0x598] sm:$0xff]
      %v438 = vld [vmem:[%s3 + $0x5a0] sm:$0xff]
      %v439 = vld [vmem:[%s3 + $0x5a8] sm:$0xff]
      %v440 = vld [vmem:[%s3 + $0x5b0] sm:$0xff]
      %v441 = vld [vmem:[%s3 + $0x5b8] sm:$0xff]
      %v442 = vld [vmem:[%s3 + $0x5c0] sm:$0xff]
      %v443 = vld [vmem:[%s3 + $0x5c8] sm:$0xff]
      %v444 = vld [vmem:[%s3 + $0x5d0] sm:$0xff]
      %v445 = vld [vmem:[%s3 + $0x5d8] sm:$0xff]
      %v446 = vld [vmem:[%s3 + $0x5e0] sm:$0xff]
      %v447 = vld [vmem:[%s3 + $0x5e8] sm:$0xff]
      %v448 = vld [vmem:[%s3 + $0x5f0] sm:$0xff]
      %v449 = vld [vmem:[%s3 + $0x5f8] sm:$0xff]
      %v450 = vld [vmem:[%s3 + $0x600] sm:$0xff]
      %v451 = vld [vmem:[%s3 + $0x608] sm:$0xff]
      %v452 = vld [vmem:[%s3 + $0x610] sm:$0xff]
      %v453 = vld [vmem:[%s3 + $0x618] sm:$0xff]
      %v454 = vld [vmem:[%s3 + $0x620] sm:$0xff]
      %v455 = vld [vmem:[%s3 + $0x628] sm:$0xff]
      %v456 = vld [vmem:[%s3 + $0x630] sm:$0xff]
      %v457 = vld [vmem:[%s3 + $0x638] sm:$0xff]
      %v458 = vld [vmem:[%s3 + $0x640] sm:$0xff]
      %v459 = vld [vmem:[%s3 + $0x648] sm:$0xff]
      %v460 = vld [vmem:[%s3 + $0x650] sm:$0xff]
      %v461 = vld [vmem:[%s3 + $0x658] sm:$0xff]
      %v462 = vld [vmem:[%s3 + $0x660] sm:$0xff]
      %v463 = vld [vmem:[%s3 + $0x668] sm:$0xff]
      %v464 = vld [vmem:[%s3 + $0x670] sm:$0xff]
      %v465 = vld [vmem:[%s3 + $0x678] sm:$0xff]
      %v466 = vld [vmem:[%s3 + $0x680] sm:$0xff]
      %v467 = vld [vmem:[%s3 + $0x688] sm:$0xff]
      %v468 = vld [vmem:[%s3 + $0x690] sm:$0xff]
      %v469 = vld [vmem:[%s3 + $0x698] sm:$0xff]
      %v470 = vld [vmem:[%s3 + $0x6a0] sm:$0xff]
      %v471 = vld [vmem:[%s3 + $0x6a8] sm:$0xff]
      %v472 = vld [vmem:[%s3 + $0x6b0] sm:$0xff]
      %v473 = vld [vmem:[%s3 + $0x6b8] sm:$0xff]
      %v474 = vld [vmem:[%s3 + $0x6c0] sm:$0xff]
      %v475 = vld [vmem:[%s3 + $0x6c8] sm:$0xff]
      %v476 = vld [vmem:[%s3 + $0x6d0] sm:$0xff]
      %v477 = vld [vmem:[%s3 + $0x6d8] sm:$0xff]
      %v478 = vld [vmem:[%s3 + $0x6e0] sm:$0xff]
      %v479 = vld [vmem:[%s3 + $0x6e8] sm:$0xff]
      %v480 = vld [vmem:[%s3 + $0x6f0] sm:$0xff]
      %v481 = vld [vmem:[%s3 + $0x6f8] sm:$0xff]
      %v482 = vld [vmem:[%s3 + $0x700] sm:$0xff]
      %v483 = vld [vmem:[%s3 + $0x708] sm:$0xff]
      %v484 = vld [vmem:[%s3 + $0x710] sm:$0xff]
      %v485 = vld [vmem:[%s3 + $0x718] sm:$0xff]
      %v486 = vld [vmem:[%s3 + $0x720] sm:$0xff]
      %v487 = vld [vmem:[%s3 + $0x728] sm:$0xff]
      %v488 = vld [vmem:[%s3 + $0x730] sm:$0xff]
      %v489 = vld [vmem:[%s3 + $0x738] sm:$0xf]
      %v490 = vld [vmem:[%s3 + $0x740] sm:$0xf]
      %v491 = vld [vmem:[%s3 + $0x748] sm:$0xf]
      %v492 = vld [vmem:[%s4] sm:$0xff]
      %v493 = vld [vmem:[%s4 + $0x8] sm:$0xff]
      %v494 = vld [vmem:[%s4 + $0x10] sm:$0xff]
      %v495 = vld [vmem:[%s4 + $0x18] sm:$0xff]
      %v496 = vld [vmem:[%s4 + $0x20] sm:$0xff]
      %v497 = vld [vmem:[%s4 + $0x28] sm:$0xff]
      %v498 = vld [vmem:[%s4 + $0x30] sm:$0xff]
      %v499 = vld [vmem:[%s4 + $0x38] sm:$0xff]
      %v500 = vld [vmem:[%s4 + $0x40] sm:$0xff]
      %v501 = vld [vmem:[%s4 + $0x48] sm:$0xff]
      %v502 = vld [vmem:[%s4 + $0x50] sm:$0xff]
      %v503 = vld [vmem:[%s4 + $0x58] sm:$0xff]
      %v504 = vld [vmem:[%s4 + $0x60] sm:$0xff]
      %v505 = vld [vmem:[%s4 + $0x68] sm:$0xff]
      %v506 = vld [vmem:[%s4 + $0x70] sm:$0xff]
      %v507 = vld [vmem:[%s4 + $0x78] sm:$0xff]
      %v508 = vld [vmem:[%s4 + $0x80] sm:$0xff]
      %v509 = vld [vmem:[%s4 + $0x88] sm:$0xff]
      %v510 = vld [vmem:[%s4 + $0x90] sm:$0xff]
      %v511 = vld [vmem:[%s4 + $0x98] sm:$0xff]
      %v512 = vld [vmem:[%s4 + $0xa0] sm:$0xff]
      %v513 = vld [vmem:[%s4 + $0xa8] sm:$0xff]
      %v514 = vld [vmem:[%s4 + $0xb0] sm:$0xff]
      %v515 = vld [vmem:[%s4 + $0xb8] sm:$0xff]
      %s516 = sld [smem:[#allocation2]]
      %v517 = vld [vmem:[%s242] sm:$0x1f]
      %v519 = vlaneseq
      %v520 = vshrl.u32 %v519, 7
      %v521 = vsub.s32 0, %v520
      %v522 = vrot.slane %v517, %v521
      %v523 = vlaneseq
      %v524 = vshrl.u32 %v523, 7
      %v525 = vsub.s32 1, %v524
      %v526 = vrot.slane %v517, %v525
      %v527 = vlaneseq
      %v528 = vshrl.u32 %v527, 7
      %v529 = vsub.s32 2, %v528
      %v530 = vrot.slane %v517, %v529
      %v531 = vlaneseq
      %v532 = vshrl.u32 %v531, 7
      %v533 = vsub.s32 3, %v532
      %v534 = vrot.slane %v517, %v533
      %v535 = vlaneseq
      %v536 = vshrl.u32 %v535, 7
      %v537 = vsub.s32 4, %v536
      %v538 = vrot.slane %v517, %v537
      %539 = vrot.lane.b32.xlu0 %v522, 1
      %v540 = vpop.permute.xlu0 %539
      %541 = vrot.lane.b32.xlu0 %v526, 1
      %v542 = vpop.permute.xlu0 %541
      %543 = vrot.lane.b32.xlu0 %v530, 1
      %v544 = vpop.permute.xlu0 %543
      %545 = vrot.lane.b32.xlu0 %v534, 1
      %v546 = vpop.permute.xlu0 %545
      %547 = vrot.lane.b32.xlu0 %v538, 1
      %v548 = vpop.permute.xlu0 %547
      %vm549 = vcmask 7168
      %v550 = vsel %vm549, %v540, %v542
      %v551 = vsel %vm549, %v542, %v544
      %v552 = vsel %vm549, %v544, %v546
      %v553 = vsel %vm549, %v546, %v548
      %v559 = vsel %vm549, 0.0, %v540
      %v560 = vlaneseq
      %v561 = vshrl.u32 %v560, 7
      %v562 = vsub.s32 0, %v561
      %v563 = vrot.slane %v559, %v562
      %v564 = vlaneseq
      %v565 = vshrl.u32 %v564, 7
      %v566 = vsub.s32 0, %v565
      %v567 = vrot.slane %v550, %v566
      %v568 = vlaneseq
      %v569 = vshrl.u32 %v568, 7
      %v570 = vsub.s32 0, %v569
      %v571 = vrot.slane %v551, %v570
      %v572 = vlaneseq
      %v573 = vshrl.u32 %v572, 7
      %v574 = vsub.s32 0, %v573
      %v575 = vrot.slane %v552, %v574
      %v576 = vlaneseq
      %v577 = vshrl.u32 %v576, 7
      %v578 = vsub.s32 0, %v577
      %v579 = vrot.slane %v553, %v578
      %581 = vset.pattern.permute.xlu0 0
      %582 = vperm.xlu0 %581, %v246
      %v583 = vpop.permute.xlu0 %582
      %586 = vset.pattern.permute.xlu0 0
      %587 = vperm.xlu0 %586, %v247
      %v588 = vpop.permute.xlu0 %587
      %591 = vset.pattern.permute.xlu0 0
      %592 = vperm.xlu0 %591, %v248
      %v593 = vpop.permute.xlu0 %592
      %596 = vset.pattern.permute.xlu0 0
      %597 = vperm.xlu0 %596, %v249
      %v598 = vpop.permute.xlu0 %597
      %v600 = vmul.f32 %v563, %v583
      %v601 = vmul.f32 %v567, %v583
      %v602 = vmul.f32 %v571, %v583
      %v603 = vmul.f32 %v575, %v583
      %v604 = vmul.f32 %v579, %v583
      %v605 = vmul.f32 %v563, %v588
      %v606 = vmul.f32 %v567, %v588
      %v607 = vmul.f32 %v571, %v588
      %v608 = vmul.f32 %v575, %v588
      %v609 = vmul.f32 %v579, %v588
      %v610 = vmul.f32 %v563, %v593
      %v611 = vmul.f32 %v567, %v593
      %v612 = vmul.f32 %v571, %v593
      %v613 = vmul.f32 %v575, %v593
      %v614 = vmul.f32 %v579, %v593
      %v615 = vmul.f32 %v563, %v598
      %v616 = vmul.f32 %v567, %v598
      %v617 = vmul.f32 %v571, %v598
      %v618 = vmul.f32 %v575, %v598
      %v619 = vmul.f32 %v579, %v598
      %625 = vset.pattern.permute.xlu0 1
      %626 = vperm.xlu0 %625, %v246
      %v627 = vpop.permute.xlu0 %626
      %629 = vset.pattern.permute.xlu0 1
      %630 = vperm.xlu0 %629, %v247
      %v631 = vpop.permute.xlu0 %630
      %633 = vset.pattern.permute.xlu0 1
      %634 = vperm.xlu0 %633, %v248
      %v635 = vpop.permute.xlu0 %634
      %637 = vset.pattern.permute.xlu0 1
      %638 = vperm.xlu0 %637, %v249
      %v639 = vpop.permute.xlu0 %638
      %v641 = vmul.f32 %v522, %v627
      %v642 = vmul.f32 %v526, %v627
      %v643 = vmul.f32 %v530, %v627
      %v644 = vmul.f32 %v534, %v627
      %v645 = vmul.f32 %v538, %v627
      %v646 = vmul.f32 %v522, %v631
      %v647 = vmul.f32 %v526, %v631
      %v648 = vmul.f32 %v530, %v631
      %v649 = vmul.f32 %v534, %v631
      %v650 = vmul.f32 %v538, %v631
      %v651 = vmul.f32 %v522, %v635
      %v652 = vmul.f32 %v526, %v635
      %v653 = vmul.f32 %v530, %v635
      %v654 = vmul.f32 %v534, %v635
      %v655 = vmul.f32 %v538, %v635
      %v656 = vmul.f32 %v522, %v639
      %v657 = vmul.f32 %v526, %v639
      %v658 = vmul.f32 %v530, %v639
      %v659 = vmul.f32 %v534, %v639
      %v660 = vmul.f32 %v538, %v639
      %v661 = vadd.f32 %v600, %v641
      %v662 = vadd.f32 %v601, %v642
      %v663 = vadd.f32 %v602, %v643
      %v664 = vadd.f32 %v603, %v644
      %v665 = vadd.f32 %v604, %v645
      %v666 = vadd.f32 %v605, %v646
      %v667 = vadd.f32 %v606, %v647
      %v668 = vadd.f32 %v607, %v648
      %v669 = vadd.f32 %v608, %v649
      %v670 = vadd.f32 %v609, %v650
      %v671 = vadd.f32 %v610, %v651
      %v672 = vadd.f32 %v611, %v652
      %v673 = vadd.f32 %v612, %v653
      %v674 = vadd.f32 %v613, %v654
      %v675 = vadd.f32 %v614, %v655
      %v676 = vadd.f32 %v615, %v656
      %v677 = vadd.f32 %v616, %v657
      %v678 = vadd.f32 %v617, %v658
      %v679 = vadd.f32 %v618, %v659
      %v680 = vadd.f32 %v619, %v660
      %681 = vrot.lane.b32.xlu0 %v522, 127
      %v682 = vpop.permute.xlu0 %681
      %683 = vrot.lane.b32.xlu0 %v526, 127
      %v684 = vpop.permute.xlu0 %683
      %685 = vrot.lane.b32.xlu0 %v530, 127
      %v686 = vpop.permute.xlu0 %685
      %687 = vrot.lane.b32.xlu0 %v534, 127
      %v688 = vpop.permute.xlu0 %687
      %689 = vrot.lane.b32.xlu0 %v538, 127
      %v690 = vpop.permute.xlu0 %689
      %vm691 = vcmask 1039360
      %v692 = vsel %vm691, %v682, %v684
      %v693 = vsel %vm691, %v684, %v686
      %v694 = vsel %vm691, %v686, %v688
      %v695 = vsel %vm691, %v688, %v690
      %vm701 = vcmask 875520
      %v702 = vsel %vm701, %v690, 0.0
      %v703 = vlaneseq
      %v704 = vshrl.u32 %v703, 7
      %v705 = vsub.s32 0, %v704
      %v706 = vrot.slane %v692, %v705
      %v707 = vlaneseq
      %v708 = vshrl.u32 %v707, 7
      %v709 = vsub.s32 0, %v708
      %v710 = vrot.slane %v693, %v709
      %v711 = vlaneseq
      %v712 = vshrl.u32 %v711, 7
      %v713 = vsub.s32 0, %v712
      %v714 = vrot.slane %v694, %v713
      %v715 = vlaneseq
      %v716 = vshrl.u32 %v715, 7
      %v717 = vsub.s32 0, %v716
      %v718 = vrot.slane %v695, %v717
      %v719 = vlaneseq
      %v720 = vshrl.u32 %v719, 7
      %v721 = vsub.s32 0, %v720
      %v722 = vrot.slane %v702, %v721
      %723 = vset.pattern.permute.xlu0 2
      %724 = vperm.xlu0 %723, %v246
      %v725 = vpop.permute.xlu0 %724
      %727 = vset.pattern.permute.xlu0 2
      %728 = vperm.xlu0 %727, %v247
      %v729 = vpop.permute.xlu0 %728
      %731 = vset.pattern.permute.xlu0 2
      %732 = vperm.xlu0 %731, %v248
      %v733 = vpop.permute.xlu0 %732
      %735 = vset.pattern.permute.xlu0 2
      %736 = vperm.xlu0 %735, %v249
      %v737 = vpop.permute.xlu0 %736
      %v739 = vmul.f32 %v706, %v725
      %v740 = vmul.f32 %v710, %v725
      %v741 = vmul.f32 %v714, %v725
      %v742 = vmul.f32 %v718, %v725
      %v743 = vmul.f32 %v722, %v725
      %v744 = vmul.f32 %v706, %v729
      %v745 = vmul.f32 %v710, %v729
      %v746 = vmul.f32 %v714, %v729
      %v747 = vmul.f32 %v718, %v729
      %v748 = vmul.f32 %v722, %v729
      %v749 = vmul.f32 %v706, %v733
      %v750 = vmul.f32 %v710, %v733
      %v751 = vmul.f32 %v714, %v733
      %v752 = vmul.f32 %v718, %v733
      %v753 = vmul.f32 %v722, %v733
      %v754 = vmul.f32 %v706, %v737
      %v755 = vmul.f32 %v710, %v737
      %v756 = vmul.f32 %v714, %v737
      %v757 = vmul.f32 %v718, %v737
      %v758 = vmul.f32 %v722, %v737
      %v759 = vadd.f32 %v661, %v739
      %v760 = vadd.f32 %v662, %v740
      %v761 = vadd.f32 %v663, %v741
      %v762 = vadd.f32 %v664, %v742
      %v763 = vadd.f32 %v665, %v743
      %v764 = vadd.f32 %v666, %v744
      %v765 = vadd.f32 %v667, %v745
      %v766 = vadd.f32 %v668, %v746
      %v767 = vadd.f32 %v669, %v747
      %v768 = vadd.f32 %v670, %v748
      %v769 = vadd.f32 %v671, %v749
      %v770 = vadd.f32 %v672, %v750
      %v771 = vadd.f32 %v673, %v751
      %v772 = vadd.f32 %v674, %v752
      %v773 = vadd.f32 %v675, %v753
      %v774 = vadd.f32 %v676, %v754
      %v775 = vadd.f32 %v677, %v755
      %v776 = vadd.f32 %v678, %v756
      %v777 = vadd.f32 %v679, %v757
      %v778 = vadd.f32 %v680, %v758
      %779 = vset.pattern.permute.xlu0 3
      %780 = vperm.xlu0 %779, %v246
      %v781 = vpop.permute.xlu0 %780
      %783 = vset.pattern.permute.xlu0 3
      %784 = vperm.xlu0 %783, %v247
      %v785 = vpop.permute.xlu0 %784
      %787 = vset.pattern.permute.xlu0 3
      %788 = vperm.xlu0 %787, %v248
      %v789 = vpop.permute.xlu0 %788
      %791 = vset.pattern.permute.xlu0 3
      %792 = vperm.xlu0 %791, %v249
      %v793 = vpop.permute.xlu0 %792
      %v795 = vadd.f32 %v759, %v781
      %v796 = vadd.f32 %v760, %v781
      %v797 = vadd.f32 %v761, %v781
      %v798 = vadd.f32 %v762, %v781
      %v799 = vadd.f32 %v763, %v781
      %v800 = vadd.f32 %v764, %v785
      %v801 = vadd.f32 %v765, %v785
      %v802 = vadd.f32 %v766, %v785
      %v803 = vadd.f32 %v767, %v785
      %v804 = vadd.f32 %v768, %v785
      %v805 = vadd.f32 %v769, %v789
      %v806 = vadd.f32 %v770, %v789
      %v807 = vadd.f32 %v771, %v789
      %v808 = vadd.f32 %v772, %v789
      %v809 = vadd.f32 %v773, %v789
      %v810 = vadd.f32 %v774, %v793
      %v811 = vadd.f32 %v775, %v793
      %v812 = vadd.f32 %v776, %v793
      %v813 = vadd.f32 %v777, %v793
      %v814 = vadd.f32 %v778, %v793
      %835 = vrot.lane.b32.xlu0 %v795, 127
      %v836 = vpop.permute.xlu0 %835
      %837 = vrot.lane.b32.xlu0 %v796, 127
      %v838 = vpop.permute.xlu0 %837
      %839 = vrot.lane.b32.xlu0 %v797, 127
      %v840 = vpop.permute.xlu0 %839
      %841 = vrot.lane.b32.xlu0 %v798, 127
      %v842 = vpop.permute.xlu0 %841
      %843 = vrot.lane.b32.xlu0 %v799, 127
      %v844 = vpop.permute.xlu0 %843
      %845 = vrot.lane.b32.xlu0 %v800, 127
      %v846 = vpop.permute.xlu0 %845
      %847 = vrot.lane.b32.xlu0 %v801, 127
      %v848 = vpop.permute.xlu0 %847
      %849 = vrot.lane.b32.xlu0 %v802, 127
      %v850 = vpop.permute.xlu0 %849
      %851 = vrot.lane.b32.xlu0 %v803, 127
      %v852 = vpop.permute.xlu0 %851
      %853 = vrot.lane.b32.xlu0 %v804, 127
      %v854 = vpop.permute.xlu0 %853
      %855 = vrot.lane.b32.xlu0 %v805, 127
      %v856 = vpop.permute.xlu0 %855
      %857 = vrot.lane.b32.xlu0 %v806, 127
      %v858 = vpop.permute.xlu0 %857
      %859 = vrot.lane.b32.xlu0 %v807, 127
      %v860 = vpop.permute.xlu0 %859
      %861 = vrot.lane.b32.xlu0 %v808, 127
      %v862 = vpop.permute.xlu0 %861
      %863 = vrot.lane.b32.xlu0 %v809, 127
      %v864 = vpop.permute.xlu0 %863
      %865 = vrot.lane.b32.xlu0 %v810, 127
      %v866 = vpop.permute.xlu0 %865
      %867 = vrot.lane.b32.xlu0 %v811, 127
      %v868 = vpop.permute.xlu0 %867
      %869 = vrot.lane.b32.xlu0 %v812, 127
      %v870 = vpop.permute.xlu0 %869
      %871 = vrot.lane.b32.xlu0 %v813, 127
      %v872 = vpop.permute.xlu0 %871
      %873 = vrot.lane.b32.xlu0 %v814, 127
      %v874 = vpop.permute.xlu0 %873
      %v875 = vsel %vm691, %v836, %v838
      %v876 = vsel %vm691, %v838, %v840
      %v877 = vsel %vm691, %v840, %v842
      %v878 = vsel %vm691, %v842, %v844
      %v879 = vsel %vm691, %v846, %v848
      %v880 = vsel %vm691, %v848, %v850
      %v881 = vsel %vm691, %v850, %v852
      %v882 = vsel %vm691, %v852, %v854
      %v883 = vsel %vm691, %v856, %v858
      %v884 = vsel %vm691, %v858, %v860
      %v885 = vsel %vm691, %v860, %v862
      %v886 = vsel %vm691, %v862, %v864
      %v887 = vsel %vm691, %v866, %v868
      %v888 = vsel %vm691, %v868, %v870
      %v889 = vsel %vm691, %v870, %v872
      %v890 = vsel %vm691, %v872, %v874
      %v911 = vsel %vm701, %v844, %v799
      %v912 = vsel %vm701, %v854, %v804
      %v913 = vsel %vm701, %v864, %v809
      %v914 = vsel %vm701, %v874, %v814
      %v915 = vmax.f32 %v795, %v875
      %v916 = vmax.f32 %v796, %v876
      %v917 = vmax.f32 %v797, %v877
      %v918 = vmax.f32 %v798, %v878
      %v919 = vmax.f32 %v799, %v911
      %v920 = vmax.f32 %v800, %v879
      %v921 = vmax.f32 %v801, %v880
      %v922 = vmax.f32 %v802, %v881
      %v923 = vmax.f32 %v803, %v882
      %v924 = vmax.f32 %v804, %v912
      %v925 = vmax.f32 %v805, %v883
      %v926 = vmax.f32 %v806, %v884
      %v927 = vmax.f32 %v807, %v885
      %v928 = vmax.f32 %v808, %v886
      %v929 = vmax.f32 %v809, %v913
      %v930 = vmax.f32 %v810, %v887
      %v931 = vmax.f32 %v811, %v888
      %v932 = vmax.f32 %v812, %v889
      %v933 = vmax.f32 %v813, %v890
      %v934 = vmax.f32 %v814, %v914
      %vm935 = vcmask 883712
      %v937 = vsel %vm935, %v919, 0
      %v940 = vsel %vm935, %v924, 0
      %v943 = vsel %vm935, %v929, 0
      %v946 = vsel %vm935, %v934, 0
      %vm948 = vcmask 1043456
      %v950 = vsel %vm948, %v489, 0
      %v953 = vsel %vm948, %v490, 0
      %v956 = vsel %vm948, %v491, 0
      %958 = vmatprep.subr.mxu0 %v304
      %959 = vmatpush1.msra.mxu0 %v303
      %960 = vmatprep.subr.mxu0 %v301
      %961 = vmatpush1.msra.mxu0 %v300
      %962 = vmatprep.subr.mxu0 %v298
      %963 = vmatpush1.msra.mxu0 %v297
      %964 = vmatprep.subr.mxu0 %v295
      %965 = vmatpush1.msra.mxu0 %v294
      %966 = vmatprep.subr.mxu0 %v292
      %967 = vmatpush1.msra.mxu0 %v291
      %968 = vmatprep.subr.mxu0 %v289
      %969 = vmatpush1.msra.mxu0 %v288
      %970 = vmatprep.subr.mxu0 %v286
      %971 = vmatpush1.msra.mxu0 %v285
      %972 = vmatprep.subr.mxu0 %v283
      %973 = vmatpush1.msra.mxu0 %v282
      %974 = vmatprep.subr.mxu0 %v280
      %975 = vmatpush1.msra.mxu0 %v279
      %976 = vmatprep.subr.mxu0 %v277
      %977 = vmatpush1.msra.mxu0 %v276
      %978 = vmatprep.subr.mxu0 %v274
      %979 = vmatpush1.msra.mxu0 %v273
      %980 = vmatprep.subr.mxu0 %v271
      %981 = vmatpush1.msra.mxu0 %v270
      %982 = vmatprep.subr.mxu0 %v268
      %983 = vmatpush1.msra.mxu0 %v267
      %984 = vmatprep.subr.mxu0 %v265
      %985 = vmatpush1.msra.mxu0 %v264
      %986 = vmatprep.subr.mxu0 %v262
      %987 = vmatpush1.msra.mxu0 %v261
      %988 = vmatprep.subr.mxu0 %v259
      %989 = vmatpush1.msra.mxu0 %v258
      %990 = vmatprep.subr.mxu0 %v352
      %991 = vmatpush2.msra.mxu0 %v351
      %992 = vmatprep.subr.mxu0 %v349
      %993 = vmatpush2.msra.mxu0 %v348
      %994 = vmatprep.subr.mxu0 %v346
      %995 = vmatpush2.msra.mxu0 %v345
      %996 = vmatprep.subr.mxu0 %v343
      %997 = vmatpush2.msra.mxu0 %v342
      %998 = vmatprep.subr.mxu0 %v340
      %999 = vmatpush2.msra.mxu0 %v339
      %1000 = vmatprep.subr.mxu0 %v337
      %1001 = vmatpush2.msra.mxu0 %v336
      %1002 = vmatprep.subr.mxu0 %v334
      %1003 = vmatpush2.msra.mxu0 %v333
      %1004 = vmatprep.subr.mxu0 %v331
      %1005 = vmatpush2.msra.mxu0 %v330
      %1006 = vmatprep.subr.mxu0 %v328
      %1007 = vmatpush2.msra.mxu0 %v327
      %1008 = vmatprep.subr.mxu0 %v325
      %1009 = vmatpush2.msra.mxu0 %v324
      %1010 = vmatprep.subr.mxu0 %v322
      %1011 = vmatpush2.msra.mxu0 %v321
      %1012 = vmatprep.subr.mxu0 %v319
      %1013 = vmatpush2.msra.mxu0 %v318
      %1014 = vmatprep.subr.mxu0 %v316
      %1015 = vmatpush2.msra.mxu0 %v315
      %1016 = vmatprep.subr.mxu0 %v313
      %1017 = vmatpush2.msra.mxu0 %v312
      %1018 = vmatprep.subr.mxu0 %v310
      %1019 = vmatpush2.msra.mxu0 %v309
      %1020 = vmatprep.subr.mxu0 %v307
      %1021 = vmatpush2.msra.mxu0 %v306
      %1022 = vmatprep.mubr.f32.mxu0 %v916
      %1023 = vmatmul.mubr.f32.gmra.mxu0 %v915
      %v1024 = vpop.f32.mrf.mxu0
      %v1025 = vadd.f32 0.0, %v1024
      %v1026 = vpop.f32.mrf.mxu0
      %v1027 = vadd.f32 0.0, %v1026
      %1028 = vmatprep.mubr.f32.mxu0 %v921
      %1029 = vmatmul.mubr.f32.gmra.mxu0 %v920
      %v1030 = vpop.f32.mrf.mxu0
      %v1031 = vadd.f32 0.0, %v1030
      %v1032 = vpop.f32.mrf.mxu0
      %v1033 = vadd.f32 0.0, %v1032
      %1034 = vmatprep.mubr.f32.mxu0 %v926
      %1035 = vmatmul.mubr.f32.gmra.mxu0 %v925
      %v1036 = vpop.f32.mrf.mxu0
      %v1037 = vadd.f32 0.0, %v1036
      %v1038 = vpop.f32.mrf.mxu0
      %v1039 = vadd.f32 0.0, %v1038
      %1040 = vmatprep.mubr.f32.mxu0 %v931
      %1041 = vmatmul.mubr.f32.gmra.mxu0 %v930
      %v1042 = vpop.f32.mrf.mxu0
      %v1043 = vadd.f32 0.0, %v1042
      %v1044 = vpop.f32.mrf.mxu0
      %v1045 = vadd.f32 0.0, %v1044
      %1046 = vdwg.mxu0
      %1047 = vmatprep.subr.mxu0 %v400
      %1048 = vmatpush1.msra.mxu0 %v399
      %1049 = vmatprep.subr.mxu0 %v397
      %1050 = vmatpush1.msra.mxu0 %v396
      %1051 = vmatprep.subr.mxu0 %v394
      %1052 = vmatpush1.msra.mxu0 %v393
      %1053 = vmatprep.subr.mxu0 %v391
      %1054 = vmatpush1.msra.mxu0 %v390
      %1055 = vmatprep.subr.mxu0 %v388
      %1056 = vmatpush1.msra.mxu0 %v387
      %1057 = vmatprep.subr.mxu0 %v385
      %1058 = vmatpush1.msra.mxu0 %v384
      %1059 = vmatprep.subr.mxu0 %v382
      %1060 = vmatpush1.msra.mxu0 %v381
      %1061 = vmatprep.subr.mxu0 %v379
      %1062 = vmatpush1.msra.mxu0 %v378
      %1063 = vmatprep.subr.mxu0 %v376
      %1064 = vmatpush1.msra.mxu0 %v375
      %1065 = vmatprep.subr.mxu0 %v373
      %1066 = vmatpush1.msra.mxu0 %v372
      %1067 = vmatprep.subr.mxu0 %v370
      %1068 = vmatpush1.msra.mxu0 %v369
      %1069 = vmatprep.subr.mxu0 %v367
      %1070 = vmatpush1.msra.mxu0 %v366
      %1071 = vmatprep.subr.mxu0 %v364
      %1072 = vmatpush1.msra.mxu0 %v363
      %1073 = vmatprep.subr.mxu0 %v361
      %1074 = vmatpush1.msra.mxu0 %v360
      %1075 = vmatprep.subr.mxu0 %v358
      %1076 = vmatpush1.msra.mxu0 %v357
      %1077 = vmatprep.subr.mxu0 %v355
      %1078 = vmatpush1.msra.mxu0 %v354
      %1079 = vmatprep.subr.mxu0 %v448
      %1080 = vmatpush2.msra.mxu0 %v447
      %1081 = vmatprep.subr.mxu0 %v445
      %1082 = vmatpush2.msra.mxu0 %v444
      %1083 = vmatprep.subr.mxu0 %v442
      %1084 = vmatpush2.msra.mxu0 %v441
      %1085 = vmatprep.subr.mxu0 %v439
      %1086 = vmatpush2.msra.mxu0 %v438
      %1087 = vmatprep.subr.mxu0 %v436
      %1088 = vmatpush2.msra.mxu0 %v435
      %1089 = vmatprep.subr.mxu0 %v433
      %1090 = vmatpush2.msra.mxu0 %v432
      %1091 = vmatprep.subr.mxu0 %v430
      %1092 = vmatpush2.msra.mxu0 %v429
      %1093 = vmatprep.subr.mxu0 %v427
      %1094 = vmatpush2.msra.mxu0 %v426
      %1095 = vmatprep.subr.mxu0 %v424
      %1096 = vmatpush2.msra.mxu0 %v423
      %1097 = vmatprep.subr.mxu0 %v421
      %1098 = vmatpush2.msra.mxu0 %v420
      %1099 = vmatprep.subr.mxu0 %v418
      %1100 = vmatpush2.msra.mxu0 %v417
      %1101 = vmatprep.subr.mxu0 %v415
      %1102 = vmatpush2.msra.mxu0 %v414
      %1103 = vmatprep.subr.mxu0 %v412
      %1104 = vmatpush2.msra.mxu0 %v411
      %1105 = vmatprep.subr.mxu0 %v409
      %1106 = vmatpush2.msra.mxu0 %v408
      %1107 = vmatprep.subr.mxu0 %v406
      %1108 = vmatpush2.msra.mxu0 %v405
      %1109 = vmatprep.subr.mxu0 %v403
      %1110 = vmatpush2.msra.mxu0 %v402
      %1111 = vmatprep.mubr.f32.mxu0 %v918
      %1112 = vmatmul.mubr.f32.gmra.mxu0 %v917
      %v1113 = vpop.f32.mrf.mxu0
      %v1114 = vadd.f32 %v1025, %v1113
      %v1115 = vpop.f32.mrf.mxu0
      %v1116 = vadd.f32 %v1027, %v1115
      %1117 = vmatprep.mubr.f32.mxu0 %v923
      %1118 = vmatmul.mubr.f32.gmra.mxu0 %v922
      %v1119 = vpop.f32.mrf.mxu0
      %v1120 = vadd.f32 %v1031, %v1119
      %v1121 = vpop.f32.mrf.mxu0
      %v1122 = vadd.f32 %v1033, %v1121
      %1123 = vmatprep.mubr.f32.mxu0 %v928
      %1124 = vmatmul.mubr.f32.gmra.mxu0 %v927
      %v1125 = vpop.f32.mrf.mxu0
      %v1126 = vadd.f32 %v1037, %v1125
      %v1127 = vpop.f32.mrf.mxu0
      %v1128 = vadd.f32 %v1039, %v1127
      %1129 = vmatprep.mubr.f32.mxu0 %v933
      %1130 = vmatmul.mubr.f32.gmra.mxu0 %v932
      %v1131 = vpop.f32.mrf.mxu0
      %v1132 = vadd.f32 %v1043, %v1131
      %v1133 = vpop.f32.mrf.mxu0
      %v1134 = vadd.f32 %v1045, %v1133
      %1135 = vdwg.mxu0
      %1136 = vmatprep.subr.mxu0 0.0
      %1137 = vmatpush1.msra.mxu0 0.0
      %1138 = vmatprep.subr.mxu0 0.0
      %1139 = vmatpush1.msra.mxu0 0.0
      %1140 = vmatprep.subr.mxu0 %v953
      %1141 = vmatpush1.msra.mxu0 %v950
      %1142 = vmatprep.subr.mxu0 %v487
      %1143 = vmatpush1.msra.mxu0 %v486
      %1144 = vmatprep.subr.mxu0 %v484
      %1145 = vmatpush1.msra.mxu0 %v483
      %1146 = vmatprep.subr.mxu0 %v481
      %1147 = vmatpush1.msra.mxu0 %v480
      %1148 = vmatprep.subr.mxu0 %v478
      %1149 = vmatpush1.msra.mxu0 %v477
      %1150 = vmatprep.subr.mxu0 %v475
      %1151 = vmatpush1.msra.mxu0 %v474
      %1152 = vmatprep.subr.mxu0 %v472
      %1153 = vmatpush1.msra.mxu0 %v471
      %1154 = vmatprep.subr.mxu0 %v469
      %1155 = vmatpush1.msra.mxu0 %v468
      %1156 = vmatprep.subr.mxu0 %v466
      %1157 = vmatpush1.msra.mxu0 %v465
      %1158 = vmatprep.subr.mxu0 %v463
      %1159 = vmatpush1.msra.mxu0 %v462
      %1160 = vmatprep.subr.mxu0 %v460
      %1161 = vmatpush1.msra.mxu0 %v459
      %1162 = vmatprep.subr.mxu0 %v457
      %1163 = vmatpush1.msra.mxu0 %v456
      %1164 = vmatprep.subr.mxu0 %v454
      %1165 = vmatpush1.msra.mxu0 %v453
      %1166 = vmatprep.subr.mxu0 %v451
      %1167 = vmatpush1.msra.mxu0 %v450
      %1168 = vmatprep.subr.mxu0 0.0
      %1169 = vmatpush2.msra.mxu0 0.0
      %1170 = vmatprep.subr.mxu0 0.0
      %1171 = vmatpush2.msra.mxu0 0.0
      %1172 = vmatprep.subr.mxu0 0.0
      %1173 = vmatpush2.msra.mxu0 0.0
      %1174 = vmatprep.subr.mxu0 0.0
      %1175 = vmatpush2.msra.mxu0 0.0
      %1176 = vmatprep.subr.mxu0 0.0
      %1177 = vmatpush2.msra.mxu0 0.0
      %1178 = vmatprep.subr.mxu0 0.0
      %1179 = vmatpush2.msra.mxu0 0.0
      %1180 = vmatprep.subr.mxu0 0.0
      %1181 = vmatpush2.msra.mxu0 0.0
      %1182 = vmatprep.subr.mxu0 0.0
      %1183 = vmatpush2.msra.mxu0 0.0
      %1184 = vmatprep.subr.mxu0 0.0
      %1185 = vmatpush2.msra.mxu0 0.0
      %1186 = vmatprep.subr.mxu0 0.0
      %1187 = vmatpush2.msra.mxu0 0.0
      %1188 = vmatprep.subr.mxu0 0.0
      %1189 = vmatpush2.msra.mxu0 0.0
      %1190 = vmatprep.subr.mxu0 0.0
      %1191 = vmatpush2.msra.mxu0 0.0
      %1192 = vmatprep.subr.mxu0 0.0
      %1193 = vmatpush2.msra.mxu0 0.0
      %1194 = vmatprep.subr.mxu0 0.0
      %1195 = vmatpush2.msra.mxu0 0.0
      %1196 = vmatprep.subr.mxu0 0.0
      %1197 = vmatpush2.msra.mxu0 0.0
      %1198 = vmatprep.subr.mxu0 0.0
      %1199 = vmatpush2.msra.mxu0 0.0
      %1200 = vmatprep.mubr.f32.mxu0 0.0
      %1201 = vmatmul.mubr.f32.gmra.mxu0 %v937
      %v1202 = vpop.f32.mrf.mxu0
      %v1203 = vadd.f32 %v1114, %v1202
      %v1204 = vpop.f32.mrf.mxu0
      %v1205 = vadd.f32 %v1116, %v1204
      %1206 = vmatprep.mubr.f32.mxu0 0.0
      %1207 = vmatmul.mubr.f32.gmra.mxu0 %v940
      %v1208 = vpop.f32.mrf.mxu0
      %v1209 = vadd.f32 %v1120, %v1208
      %v1210 = vpop.f32.mrf.mxu0
      %v1211 = vadd.f32 %v1122, %v1210
      %1212 = vmatprep.mubr.f32.mxu0 0.0
      %1213 = vmatmul.mubr.f32.gmra.mxu0 %v943
      %v1214 = vpop.f32.mrf.mxu0
      %v1215 = vadd.f32 %v1126, %v1214
      %v1216 = vpop.f32.mrf.mxu0
      %v1217 = vadd.f32 %v1128, %v1216
      %1218 = vmatprep.mubr.f32.mxu0 0.0
      %1219 = vmatmul.mubr.f32.gmra.mxu0 %v946
      %v1220 = vpop.f32.mrf.mxu0
      %v1221 = vadd.f32 %v1132, %v1220
      %v1222 = vpop.f32.mrf.mxu0
      %v1223 = vadd.f32 %v1134, %v1222
      %1224 = vdwg.mxu0
      %1225 = vmatprep.subr.mxu0 0.0
      %1226 = vmatpush1.msra.mxu0 %v305
      %1227 = vmatprep.subr.mxu0 0.0
      %1228 = vmatpush1.msra.mxu0 %v302
      %1229 = vmatprep.subr.mxu0 0.0
      %1230 = vmatpush1.msra.mxu0 %v299
      %1231 = vmatprep.subr.mxu0 0.0
      %1232 = vmatpush1.msra.mxu0 %v296
      %1233 = vmatprep.subr.mxu0 0.0
      %1234 = vmatpush1.msra.mxu0 %v293
      %1235 = vmatprep.subr.mxu0 0.0
      %1236 = vmatpush1.msra.mxu0 %v290
      %1237 = vmatprep.subr.mxu0 0.0
      %1238 = vmatpush1.msra.mxu0 %v287
      %1239 = vmatprep.subr.mxu0 0.0
      %1240 = vmatpush1.msra.mxu0 %v284
      %1241 = vmatprep.subr.mxu0 0.0
      %1242 = vmatpush1.msra.mxu0 %v281
      %1243 = vmatprep.subr.mxu0 0.0
      %1244 = vmatpush1.msra.mxu0 %v278
      %1245 = vmatprep.subr.mxu0 0.0
      %1246 = vmatpush1.msra.mxu0 %v275
      %1247 = vmatprep.subr.mxu0 0.0
      %1248 = vmatpush1.msra.mxu0 %v272
      %1249 = vmatprep.subr.mxu0 0.0
      %1250 = vmatpush1.msra.mxu0 %v269
      %1251 = vmatprep.subr.mxu0 0.0
      %1252 = vmatpush1.msra.mxu0 %v266
      %1253 = vmatprep.subr.mxu0 0.0
      %1254 = vmatpush1.msra.mxu0 %v263
      %1255 = vmatprep.subr.mxu0 0.0
      %1256 = vmatpush1.msra.mxu0 %v260
      %1257 = vmatprep.subr.mxu0 0.0
      %1258 = vmatpush2.msra.mxu0 %v353
      %1259 = vmatprep.subr.mxu0 0.0
      %1260 = vmatpush2.msra.mxu0 %v350
      %1261 = vmatprep.subr.mxu0 0.0
      %1262 = vmatpush2.msra.mxu0 %v347
      %1263 = vmatprep.subr.mxu0 0.0
      %1264 = vmatpush2.msra.mxu0 %v344
      %1265 = vmatprep.subr.mxu0 0.0
      %1266 = vmatpush2.msra.mxu0 %v341
      %1267 = vmatprep.subr.mxu0 0.0
      %1268 = vmatpush2.msra.mxu0 %v338
      %1269 = vmatprep.subr.mxu0 0.0
      %1270 = vmatpush2.msra.mxu0 %v335
      %1271 = vmatprep.subr.mxu0 0.0
      %1272 = vmatpush2.msra.mxu0 %v332
      %1273 = vmatprep.subr.mxu0 0.0
      %1274 = vmatpush2.msra.mxu0 %v329
      %1275 = vmatprep.subr.mxu0 0.0
      %1276 = vmatpush2.msra.mxu0 %v326
      %1277 = vmatprep.subr.mxu0 0.0
      %1278 = vmatpush2.msra.mxu0 %v323
      %1279 = vmatprep.subr.mxu0 0.0
      %1280 = vmatpush2.msra.mxu0 %v320
      %1281 = vmatprep.subr.mxu0 0.0
      %1282 = vmatpush2.msra.mxu0 %v317
      %1283 = vmatprep.subr.mxu0 0.0
      %1284 = vmatpush2.msra.mxu0 %v314
      %1285 = vmatprep.subr.mxu0 0.0
      %1286 = vmatpush2.msra.mxu0 %v311
      %1287 = vmatprep.subr.mxu0 0.0
      %1288 = vmatpush2.msra.mxu0 %v308
      %1289 = vmatprep.mubr.f32.mxu0 %v916
      %1290 = vmatmul.mubr.f32.gmra.mxu0 %v915
      %v1291 = vpop.f32.mrf.mxu0
      %v1292 = vadd.f32 0.0, %v1291
      %v1293 = vpop.f32.mrf.mxu0
      %1294 = vmatprep.mubr.f32.mxu0 %v921
      %1295 = vmatmul.mubr.f32.gmra.mxu0 %v920
      %v1296 = vpop.f32.mrf.mxu0
      %v1297 = vadd.f32 0.0, %v1296
      %v1298 = vpop.f32.mrf.mxu0
      %1299 = vmatprep.mubr.f32.mxu0 %v926
      %1300 = vmatmul.mubr.f32.gmra.mxu0 %v925
      %v1301 = vpop.f32.mrf.mxu0
      %v1302 = vadd.f32 0.0, %v1301
      %v1303 = vpop.f32.mrf.mxu0
      %1304 = vmatprep.mubr.f32.mxu0 %v931
      %1305 = vmatmul.mubr.f32.gmra.mxu0 %v930
      %v1306 = vpop.f32.mrf.mxu0
      %v1307 = vadd.f32 0.0, %v1306
      %v1308 = vpop.f32.mrf.mxu0
      %1309 = vdwg.mxu0
      %1310 = vmatprep.subr.mxu0 0.0
      %1311 = vmatpush1.msra.mxu0 %v401
      %1312 = vmatprep.subr.mxu0 0.0
      %1313 = vmatpush1.msra.mxu0 %v398
      %1314 = vmatprep.subr.mxu0 0.0
      %1315 = vmatpush1.msra.mxu0 %v395
      %1316 = vmatprep.subr.mxu0 0.0
      %1317 = vmatpush1.msra.mxu0 %v392
      %1318 = vmatprep.subr.mxu0 0.0
      %1319 = vmatpush1.msra.mxu0 %v389
      %1320 = vmatprep.subr.mxu0 0.0
      %1321 = vmatpush1.msra.mxu0 %v386
      %1322 = vmatprep.subr.mxu0 0.0
      %1323 = vmatpush1.msra.mxu0 %v383
      %1324 = vmatprep.subr.mxu0 0.0
      %1325 = vmatpush1.msra.mxu0 %v380
      %1326 = vmatprep.subr.mxu0 0.0
      %1327 = vmatpush1.msra.mxu0 %v377
      %1328 = vmatprep.subr.mxu0 0.0
      %1329 = vmatpush1.msra.mxu0 %v374
      %1330 = vmatprep.subr.mxu0 0.0
      %1331 = vmatpush1.msra.mxu0 %v371
      %1332 = vmatprep.subr.mxu0 0.0
      %1333 = vmatpush1.msra.mxu0 %v368
      %1334 = vmatprep.subr.mxu0 0.0
      %1335 = vmatpush1.msra.mxu0 %v365
      %1336 = vmatprep.subr.mxu0 0.0
      %1337 = vmatpush1.msra.mxu0 %v362
      %1338 = vmatprep.subr.mxu0 0.0
      %1339 = vmatpush1.msra.mxu0 %v359
      %1340 = vmatprep.subr.mxu0 0.0
      %1341 = vmatpush1.msra.mxu0 %v356
      %1342 = vmatprep.subr.mxu0 0.0
      %1343 = vmatpush2.msra.mxu0 %v449
      %1344 = vmatprep.subr.mxu0 0.0
      %1345 = vmatpush2.msra.mxu0 %v446
      %1346 = vmatprep.subr.mxu0 0.0
      %1347 = vmatpush2.msra.mxu0 %v443
      %1348 = vmatprep.subr.mxu0 0.0
      %1349 = vmatpush2.msra.mxu0 %v440
      %1350 = vmatprep.subr.mxu0 0.0
      %1351 = vmatpush2.msra.mxu0 %v437
      %1352 = vmatprep.subr.mxu0 0.0
      %1353 = vmatpush2.msra.mxu0 %v434
      %1354 = vmatprep.subr.mxu0 0.0
      %1355 = vmatpush2.msra.mxu0 %v431
      %1356 = vmatprep.subr.mxu0 0.0
      %1357 = vmatpush2.msra.mxu0 %v428
      %1358 = vmatprep.subr.mxu0 0.0
      %1359 = vmatpush2.msra.mxu0 %v425
      %1360 = vmatprep.subr.mxu0 0.0
      %1361 = vmatpush2.msra.mxu0 %v422
      %1362 = vmatprep.subr.mxu0 0.0
      %1363 = vmatpush2.msra.mxu0 %v419
      %1364 = vmatprep.subr.mxu0 0.0
      %1365 = vmatpush2.msra.mxu0 %v416
      %1366 = vmatprep.subr.mxu0 0.0
      %1367 = vmatpush2.msra.mxu0 %v413
      %1368 = vmatprep.subr.mxu0 0.0
      %1369 = vmatpush2.msra.mxu0 %v410
      %1370 = vmatprep.subr.mxu0 0.0
      %1371 = vmatpush2.msra.mxu0 %v407
      %1372 = vmatprep.subr.mxu0 0.0
      %1373 = vmatpush2.msra.mxu0 %v404
      %1374 = vmatprep.mubr.f32.mxu0 %v918
      %1375 = vmatmul.mubr.f32.gmra.mxu0 %v917
      %v1376 = vpop.f32.mrf.mxu0
      %v1377 = vadd.f32 %v1292, %v1376
      %v1378 = vpop.f32.mrf.mxu0
      %1379 = vmatprep.mubr.f32.mxu0 %v923
      %1380 = vmatmul.mubr.f32.gmra.mxu0 %v922
      %v1381 = vpop.f32.mrf.mxu0
      %v1382 = vadd.f32 %v1297, %v1381
      %v1383 = vpop.f32.mrf.mxu0
      %1384 = vmatprep.mubr.f32.mxu0 %v928
      %1385 = vmatmul.mubr.f32.gmra.mxu0 %v927
      %v1386 = vpop.f32.mrf.mxu0
      %v1387 = vadd.f32 %v1302, %v1386
      %v1388 = vpop.f32.mrf.mxu0
      %1389 = vmatprep.mubr.f32.mxu0 %v933
      %1390 = vmatmul.mubr.f32.gmra.mxu0 %v932
      %v1391 = vpop.f32.mrf.mxu0
      %v1392 = vadd.f32 %v1307, %v1391
      %v1393 = vpop.f32.mrf.mxu0
      %1394 = vdwg.mxu0
      %1395 = vmatprep.subr.mxu0 0.0
      %1396 = vmatpush1.msra.mxu0 0.0
      %1397 = vmatprep.subr.mxu0 0.0
      %1398 = vmatpush1.msra.mxu0 0.0
      %1399 = vmatprep.subr.mxu0 0.0
      %1400 = vmatpush1.msra.mxu0 %v956
      %1401 = vmatprep.subr.mxu0 0.0
      %1402 = vmatpush1.msra.mxu0 %v488
      %1403 = vmatprep.subr.mxu0 0.0
      %1404 = vmatpush1.msra.mxu0 %v485
      %1405 = vmatprep.subr.mxu0 0.0
      %1406 = vmatpush1.msra.mxu0 %v482
      %1407 = vmatprep.subr.mxu0 0.0
      %1408 = vmatpush1.msra.mxu0 %v479
      %1409 = vmatprep.subr.mxu0 0.0
      %1410 = vmatpush1.msra.mxu0 %v476
      %1411 = vmatprep.subr.mxu0 0.0
      %1412 = vmatpush1.msra.mxu0 %v473
      %1413 = vmatprep.subr.mxu0 0.0
      %1414 = vmatpush1.msra.mxu0 %v470
      %1415 = vmatprep.subr.mxu0 0.0
      %1416 = vmatpush1.msra.mxu0 %v467
      %1417 = vmatprep.subr.mxu0 0.0
      %1418 = vmatpush1.msra.mxu0 %v464
      %1419 = vmatprep.subr.mxu0 0.0
      %1420 = vmatpush1.msra.mxu0 %v461
      %1421 = vmatprep.subr.mxu0 0.0
      %1422 = vmatpush1.msra.mxu0 %v458
      %1423 = vmatprep.subr.mxu0 0.0
      %1424 = vmatpush1.msra.mxu0 %v455
      %1425 = vmatprep.subr.mxu0 0.0
      %1426 = vmatpush1.msra.mxu0 %v452
      %1427 = vmatprep.subr.mxu0 0.0
      %1428 = vmatpush2.msra.mxu0 0.0
      %1429 = vmatprep.subr.mxu0 0.0
      %1430 = vmatpush2.msra.mxu0 0.0
      %1431 = vmatprep.subr.mxu0 0.0
      %1432 = vmatpush2.msra.mxu0 0.0
      %1433 = vmatprep.subr.mxu0 0.0
      %1434 = vmatpush2.msra.mxu0 0.0
      %1435 = vmatprep.subr.mxu0 0.0
      %1436 = vmatpush2.msra.mxu0 0.0
      %1437 = vmatprep.subr.mxu0 0.0
      %1438 = vmatpush2.msra.mxu0 0.0
      %1439 = vmatprep.subr.mxu0 0.0
      %1440 = vmatpush2.msra.mxu0 0.0
      %1441 = vmatprep.subr.mxu0 0.0
      %1442 = vmatpush2.msra.mxu0 0.0
      %1443 = vmatprep.subr.mxu0 0.0
      %1444 = vmatpush2.msra.mxu0 0.0
      %1445 = vmatprep.subr.mxu0 0.0
      %1446 = vmatpush2.msra.mxu0 0.0
      %1447 = vmatprep.subr.mxu0 0.0
      %1448 = vmatpush2.msra.mxu0 0.0
      %1449 = vmatprep.subr.mxu0 0.0
      %1450 = vmatpush2.msra.mxu0 0.0
      %1451 = vmatprep.subr.mxu0 0.0
      %1452 = vmatpush2.msra.mxu0 0.0
      %1453 = vmatprep.subr.mxu0 0.0
      %1454 = vmatpush2.msra.mxu0 0.0
      %1455 = vmatprep.subr.mxu0 0.0
      %1456 = vmatpush2.msra.mxu0 0.0
      %1457 = vmatprep.subr.mxu0 0.0
      %1458 = vmatpush2.msra.mxu0 0.0
      %1459 = vmatprep.mubr.f32.mxu0 0.0
      %1460 = vmatmul.mubr.f32.gmra.mxu0 %v937
      %v1461 = vpop.f32.mrf.mxu0
      %v1462 = vadd.f32 %v1377, %v1461
      %v1463 = vpop.f32.mrf.mxu0
      %1464 = vmatprep.mubr.f32.mxu0 0.0
      %1465 = vmatmul.mubr.f32.gmra.mxu0 %v940
      %v1466 = vpop.f32.mrf.mxu0
      %v1467 = vadd.f32 %v1382, %v1466
      %v1468 = vpop.f32.mrf.mxu0
      %1469 = vmatprep.mubr.f32.mxu0 0.0
      %1470 = vmatmul.mubr.f32.gmra.mxu0 %v943
      %v1471 = vpop.f32.mrf.mxu0
      %v1472 = vadd.f32 %v1387, %v1471
      %v1473 = vpop.f32.mrf.mxu0
      %1474 = vmatprep.mubr.f32.mxu0 0.0
      %1475 = vmatmul.mubr.f32.gmra.mxu0 %v946
      %v1476 = vpop.f32.mrf.mxu0
      %v1477 = vadd.f32 %v1392, %v1476
      %v1478 = vpop.f32.mrf.mxu0
      %1479 = vdwg.mxu0
      %1492 = vrot.lane.b32.xlu0 %v1203, 1
      %v1493 = vpop.permute.xlu0 %1492
      %1494 = vrot.lane.b32.xlu0 %v1205, 1
      %v1495 = vpop.permute.xlu0 %1494
      %1496 = vrot.lane.b32.xlu0 %v1462, 1
      %v1497 = vpop.permute.xlu0 %1496
      %1498 = vrot.lane.b32.xlu0 %v1209, 1
      %v1499 = vpop.permute.xlu0 %1498
      %1500 = vrot.lane.b32.xlu0 %v1211, 1
      %v1501 = vpop.permute.xlu0 %1500
      %1502 = vrot.lane.b32.xlu0 %v1467, 1
      %v1503 = vpop.permute.xlu0 %1502
      %1504 = vrot.lane.b32.xlu0 %v1215, 1
      %v1505 = vpop.permute.xlu0 %1504
      %1506 = vrot.lane.b32.xlu0 %v1217, 1
      %v1507 = vpop.permute.xlu0 %1506
      %1508 = vrot.lane.b32.xlu0 %v1472, 1
      %v1509 = vpop.permute.xlu0 %1508
      %1510 = vrot.lane.b32.xlu0 %v1221, 1
      %v1511 = vpop.permute.xlu0 %1510
      %1512 = vrot.lane.b32.xlu0 %v1223, 1
      %v1513 = vpop.permute.xlu0 %1512
      %1514 = vrot.lane.b32.xlu0 %v1477, 1
      %v1515 = vpop.permute.xlu0 %1514
      %v1516 = vsel %vm549, %v1493, %v1495
      %v1517 = vsel %vm549, %v1495, %v1497
      %v1518 = vsel %vm549, %v1499, %v1501
      %v1519 = vsel %vm549, %v1501, %v1503
      %v1520 = vsel %vm549, %v1505, %v1507
      %v1521 = vsel %vm549, %v1507, %v1509
      %v1522 = vsel %vm549, %v1511, %v1513
      %v1523 = vsel %vm549, %v1513, %v1515
      %v1536 = vsel %vm549, 0.0, %v1493
      %v1537 = vsel %vm549, 0.0, %v1499
      %v1538 = vsel %vm549, 0.0, %v1505
      %v1539 = vsel %vm549, 0.0, %v1511
      %1540 = vrot.lane.b32.xlu0 %v1203, 127
      %v1541 = vpop.permute.xlu0 %1540
      %1542 = vrot.lane.b32.xlu0 %v1205, 127
      %v1543 = vpop.permute.xlu0 %1542
      %1544 = vrot.lane.b32.xlu0 %v1462, 127
      %v1545 = vpop.permute.xlu0 %1544
      %1546 = vrot.lane.b32.xlu0 %v1209, 127
      %v1547 = vpop.permute.xlu0 %1546
      %1548 = vrot.lane.b32.xlu0 %v1211, 127
      %v1549 = vpop.permute.xlu0 %1548
      %1550 = vrot.lane.b32.xlu0 %v1467, 127
      %v1551 = vpop.permute.xlu0 %1550
      %1552 = vrot.lane.b32.xlu0 %v1215, 127
      %v1553 = vpop.permute.xlu0 %1552
      %1554 = vrot.lane.b32.xlu0 %v1217, 127
      %v1555 = vpop.permute.xlu0 %1554
      %1556 = vrot.lane.b32.xlu0 %v1472, 127
      %v1557 = vpop.permute.xlu0 %1556
      %1558 = vrot.lane.b32.xlu0 %v1221, 127
      %v1559 = vpop.permute.xlu0 %1558
      %1560 = vrot.lane.b32.xlu0 %v1223, 127
      %v1561 = vpop.permute.xlu0 %1560
      %1562 = vrot.lane.b32.xlu0 %v1477, 127
      %v1563 = vpop.permute.xlu0 %1562
      %v1564 = vsel %vm691, %v1541, %v1543
      %v1565 = vsel %vm691, %v1543, %v1545
      %v1566 = vsel %vm691, %v1547, %v1549
      %v1567 = vsel %vm691, %v1549, %v1551
      %v1568 = vsel %vm691, %v1553, %v1555
      %v1569 = vsel %vm691, %v1555, %v1557
      %v1570 = vsel %vm691, %v1559, %v1561
      %v1571 = vsel %vm691, %v1561, %v1563
      %vm1584 = vcmask 433152
      %v1585 = vsel %vm1584, %v1545, 0.0
      %v1586 = vsel %vm1584, %v1551, 0.0
      %v1587 = vsel %vm1584, %v1557, 0.0
      %v1588 = vsel %vm1584, %v1563, 0.0
      %1590 = vset.pattern.permute.xlu0 96
      %1591 = vperm.xlu0 %1590, %v250
      %v1592 = vpop.permute.xlu0 %1591
      %1595 = vset.pattern.permute.xlu0 96
      %1596 = vperm.xlu0 %1595, %v251
      %v1597 = vpop.permute.xlu0 %1596
      %1600 = vset.pattern.permute.xlu0 96
      %1601 = vperm.xlu0 %1600, %v252
      %v1602 = vpop.permute.xlu0 %1601
      %1605 = vset.pattern.permute.xlu0 96
      %1606 = vperm.xlu0 %1605, %v253
      %v1607 = vpop.permute.xlu0 %1606
      %1610 = vset.pattern.permute.xlu0 96
      %1611 = vperm.xlu0 %1610, %v254
      %v1612 = vpop.permute.xlu0 %1611
      %1615 = vset.pattern.permute.xlu0 96
      %1616 = vperm.xlu0 %1615, %v255
      %v1617 = vpop.permute.xlu0 %1616
      %1620 = vset.pattern.permute.xlu0 96
      %1621 = vperm.xlu0 %1620, %v256
      %v1622 = vpop.permute.xlu0 %1621
      %1625 = vset.pattern.permute.xlu0 96
      %1626 = vperm.xlu0 %1625, %v257
      %v1627 = vpop.permute.xlu0 %1626
      %vm1629 = vcmask 785408
      %v1630 = vsel %vm1629, %v250, 0
      %v1632 = vsel %vm1629, %v251, 0
      %v1634 = vsel %vm1629, %v252, 0
      %v1636 = vsel %vm1629, %v253, 0
      %v1638 = vsel %vm1629, %v254, 0
      %v1640 = vsel %vm1629, %v255, 0
      %v1642 = vsel %vm1629, %v256, 0
      %v1644 = vsel %vm1629, %v257, 0
      %1646 = vmatprep.subr.mxu0 0.0
      %1647 = vmatpush1.msra.mxu0 0.0
      %1648 = vmatprep.subr.mxu0 0.0
      %1649 = vmatpush1.msra.mxu0 0.0
      %1650 = vmatprep.subr.mxu0 0.0
      %1651 = vmatpush1.msra.mxu0 0.0
      %1652 = vmatprep.subr.mxu0 0.0
      %1653 = vmatpush1.msra.mxu0 0.0
      %1654 = vmatprep.subr.mxu0 %v1571
      %1655 = vmatpush1.msra.mxu0 %v1570
      %1656 = vmatprep.subr.mxu0 %v1569
      %1657 = vmatpush1.msra.mxu0 %v1568
      %1658 = vmatprep.subr.mxu0 %v1567
      %1659 = vmatpush1.msra.mxu0 %v1566
      %1660 = vmatprep.subr.mxu0 %v1565
      %1661 = vmatpush1.msra.mxu0 %v1564
      %1662 = vmatprep.subr.mxu0 %v1223
      %1663 = vmatpush1.msra.mxu0 %v1221
      %1664 = vmatprep.subr.mxu0 %v1217
      %1665 = vmatpush1.msra.mxu0 %v1215
      %1666 = vmatprep.subr.mxu0 %v1211
      %1667 = vmatpush1.msra.mxu0 %v1209
      %1668 = vmatprep.subr.mxu0 %v1205
      %1669 = vmatpush1.msra.mxu0 %v1203
      %1670 = vmatprep.subr.mxu0 %v1522
      %1671 = vmatpush1.msra.mxu0 %v1539
      %1672 = vmatprep.subr.mxu0 %v1520
      %1673 = vmatpush1.msra.mxu0 %v1538
      %1674 = vmatprep.subr.mxu0 %v1518
      %1675 = vmatpush1.msra.mxu0 %v1537
      %1676 = vmatprep.subr.mxu0 %v1516
      %1677 = vmatpush1.msra.mxu0 %v1536
      %1678 = vmatprep.subr.mxu0 0.0
      %1679 = vmatpush2.msra.mxu0 0.0
      %1680 = vmatprep.subr.mxu0 0.0
      %1681 = vmatpush2.msra.mxu0 0.0
      %1682 = vmatprep.subr.mxu0 0.0
      %1683 = vmatpush2.msra.mxu0 0.0
      %1684 = vmatprep.subr.mxu0 0.0
      %1685 = vmatpush2.msra.mxu0 0.0
      %1686 = vmatprep.subr.mxu0 0.0
      %1687 = vmatpush2.msra.mxu0 0.0
      %1688 = vmatprep.subr.mxu0 0.0
      %1689 = vmatpush2.msra.mxu0 0.0
      %1690 = vmatprep.subr.mxu0 0.0
      %1691 = vmatpush2.msra.mxu0 0.0
      %1692 = vmatprep.subr.mxu0 0.0
      %1693 = vmatpush2.msra.mxu0 0.0
      %1694 = vmatprep.subr.mxu0 0.0
      %1695 = vmatpush2.msra.mxu0 0.0
      %1696 = vmatprep.subr.mxu0 0.0
      %1697 = vmatpush2.msra.mxu0 0.0
      %1698 = vmatprep.subr.mxu0 0.0
      %1699 = vmatpush2.msra.mxu0 0.0
      %1700 = vmatprep.subr.mxu0 0.0
      %1701 = vmatpush2.msra.mxu0 0.0
      %1702 = vmatprep.subr.mxu0 0.0
      %1703 = vmatpush2.msra.mxu0 0.0
      %1704 = vmatprep.subr.mxu0 0.0
      %1705 = vmatpush2.msra.mxu0 0.0
      %1706 = vmatprep.subr.mxu0 0.0
      %1707 = vmatpush2.msra.mxu0 0.0
      %1708 = vmatprep.subr.mxu0 0.0
      %1709 = vmatpush2.msra.mxu0 0.0
      %1710 = vmatprep.mubr.f32.mxu0 0.0
      %1711 = vmatmul.mubr.f32.gmra.mxu0 %v1630
      %v1712 = vpop.f32.mrf.mxu0
      %v1713 = vadd.f32 %v1592, %v1712
      %v1714 = vpop.f32.mrf.mxu0
      %v1715 = vadd.f32 %v1592, %v1714
      %1716 = vmatprep.mubr.f32.mxu0 0.0
      %1717 = vmatmul.mubr.f32.gmra.mxu0 %v1632
      %v1718 = vpop.f32.mrf.mxu0
      %v1719 = vadd.f32 %v1597, %v1718
      %v1720 = vpop.f32.mrf.mxu0
      %v1721 = vadd.f32 %v1597, %v1720
      %1722 = vmatprep.mubr.f32.mxu0 0.0
      %1723 = vmatmul.mubr.f32.gmra.mxu0 %v1634
      %v1724 = vpop.f32.mrf.mxu0
      %v1725 = vadd.f32 %v1602, %v1724
      %v1726 = vpop.f32.mrf.mxu0
      %v1727 = vadd.f32 %v1602, %v1726
      %1728 = vmatprep.mubr.f32.mxu0 0.0
      %1729 = vmatmul.mubr.f32.gmra.mxu0 %v1636
      %v1730 = vpop.f32.mrf.mxu0
      %v1731 = vadd.f32 %v1607, %v1730
      %v1732 = vpop.f32.mrf.mxu0
      %v1733 = vadd.f32 %v1607, %v1732
      %1734 = vmatprep.mubr.f32.mxu0 0.0
      %1735 = vmatmul.mubr.f32.gmra.mxu0 %v1638
      %v1736 = vpop.f32.mrf.mxu0
      %v1737 = vadd.f32 %v1612, %v1736
      %v1738 = vpop.f32.mrf.mxu0
      %v1739 = vadd.f32 %v1612, %v1738
      %1740 = vmatprep.mubr.f32.mxu0 0.0
      %1741 = vmatmul.mubr.f32.gmra.mxu0 %v1640
      %v1742 = vpop.f32.mrf.mxu0
      %v1743 = vadd.f32 %v1617, %v1742
      %v1744 = vpop.f32.mrf.mxu0
      %v1745 = vadd.f32 %v1617, %v1744
      %1746 = vmatprep.mubr.f32.mxu0 0.0
      %1747 = vmatmul.mubr.f32.gmra.mxu0 %v1642
      %v1748 = vpop.f32.mrf.mxu0
      %v1749 = vadd.f32 %v1622, %v1748
      %v1750 = vpop.f32.mrf.mxu0
      %v1751 = vadd.f32 %v1622, %v1750
      %1752 = vmatprep.mubr.f32.mxu0 0.0
      %1753 = vmatmul.mubr.f32.gmra.mxu0 %v1644
      %v1754 = vpop.f32.mrf.mxu0
      %v1755 = vadd.f32 %v1627, %v1754
      %v1756 = vpop.f32.mrf.mxu0
      %v1757 = vadd.f32 %v1627, %v1756
      %1758 = vdwg.mxu0
      %1759 = vmatprep.subr.mxu0 0.0
      %1760 = vmatpush1.msra.mxu0 0.0
      %1761 = vmatprep.subr.mxu0 0.0
      %1762 = vmatpush1.msra.mxu0 0.0
      %1763 = vmatprep.subr.mxu0 0.0
      %1764 = vmatpush1.msra.mxu0 0.0
      %1765 = vmatprep.subr.mxu0 0.0
      %1766 = vmatpush1.msra.mxu0 0.0
      %1767 = vmatprep.subr.mxu0 0.0
      %1768 = vmatpush1.msra.mxu0 %v1588
      %1769 = vmatprep.subr.mxu0 0.0
      %1770 = vmatpush1.msra.mxu0 %v1587
      %1771 = vmatprep.subr.mxu0 0.0
      %1772 = vmatpush1.msra.mxu0 %v1586
      %1773 = vmatprep.subr.mxu0 0.0
      %1774 = vmatpush1.msra.mxu0 %v1585
      %1775 = vmatprep.subr.mxu0 0.0
      %1776 = vmatpush1.msra.mxu0 %v1477
      %1777 = vmatprep.subr.mxu0 0.0
      %1778 = vmatpush1.msra.mxu0 %v1472
      %1779 = vmatprep.subr.mxu0 0.0
      %1780 = vmatpush1.msra.mxu0 %v1467
      %1781 = vmatprep.subr.mxu0 0.0
      %1782 = vmatpush1.msra.mxu0 %v1462
      %1783 = vmatprep.subr.mxu0 0.0
      %1784 = vmatpush1.msra.mxu0 %v1523
      %1785 = vmatprep.subr.mxu0 0.0
      %1786 = vmatpush1.msra.mxu0 %v1521
      %1787 = vmatprep.subr.mxu0 0.0
      %1788 = vmatpush1.msra.mxu0 %v1519
      %1789 = vmatprep.subr.mxu0 0.0
      %1790 = vmatpush1.msra.mxu0 %v1517
      %1791 = vmatprep.subr.mxu0 0.0
      %1792 = vmatpush2.msra.mxu0 0.0
      %1793 = vmatprep.subr.mxu0 0.0
      %1794 = vmatpush2.msra.mxu0 0.0
      %1795 = vmatprep.subr.mxu0 0.0
      %1796 = vmatpush2.msra.mxu0 0.0
      %1797 = vmatprep.subr.mxu0 0.0
      %1798 = vmatpush2.msra.mxu0 0.0
      %1799 = vmatprep.subr.mxu0 0.0
      %1800 = vmatpush2.msra.mxu0 0.0
      %1801 = vmatprep.subr.mxu0 0.0
      %1802 = vmatpush2.msra.mxu0 0.0
      %1803 = vmatprep.subr.mxu0 0.0
      %1804 = vmatpush2.msra.mxu0 0.0
      %1805 = vmatprep.subr.mxu0 0.0
      %1806 = vmatpush2.msra.mxu0 0.0
      %1807 = vmatprep.subr.mxu0 0.0
      %1808 = vmatpush2.msra.mxu0 0.0
      %1809 = vmatprep.subr.mxu0 0.0
      %1810 = vmatpush2.msra.mxu0 0.0
      %1811 = vmatprep.subr.mxu0 0.0
      %1812 = vmatpush2.msra.mxu0 0.0
      %1813 = vmatprep.subr.mxu0 0.0
      %1814 = vmatpush2.msra.mxu0 0.0
      %1815 = vmatprep.subr.mxu0 0.0
      %1816 = vmatpush2.msra.mxu0 0.0
      %1817 = vmatprep.subr.mxu0 0.0
      %1818 = vmatpush2.msra.mxu0 0.0
      %1819 = vmatprep.subr.mxu0 0.0
      %1820 = vmatpush2.msra.mxu0 0.0
      %1821 = vmatprep.subr.mxu0 0.0
      %1822 = vmatpush2.msra.mxu0 0.0
      %1823 = vmatprep.mubr.f32.mxu0 0.0
      %1824 = vmatmul.mubr.f32.gmra.mxu0 %v1630
      %v1825 = vpop.f32.mrf.mxu0
      %v1826 = vadd.f32 %v1592, %v1825
      %v1827 = vpop.f32.mrf.mxu0
      %1828 = vmatprep.mubr.f32.mxu0 0.0
      %1829 = vmatmul.mubr.f32.gmra.mxu0 %v1632
      %v1830 = vpop.f32.mrf.mxu0
      %v1831 = vadd.f32 %v1597, %v1830
      %v1832 = vpop.f32.mrf.mxu0
      %1833 = vmatprep.mubr.f32.mxu0 0.0
      %1834 = vmatmul.mubr.f32.gmra.mxu0 %v1634
      %v1835 = vpop.f32.mrf.mxu0
      %v1836 = vadd.f32 %v1602, %v1835
      %v1837 = vpop.f32.mrf.mxu0
      %1838 = vmatprep.mubr.f32.mxu0 0.0
      %1839 = vmatmul.mubr.f32.gmra.mxu0 %v1636
      %v1840 = vpop.f32.mrf.mxu0
      %v1841 = vadd.f32 %v1607, %v1840
      %v1842 = vpop.f32.mrf.mxu0
      %1843 = vmatprep.mubr.f32.mxu0 0.0
      %1844 = vmatmul.mubr.f32.gmra.mxu0 %v1638
      %v1845 = vpop.f32.mrf.mxu0
      %v1846 = vadd.f32 %v1612, %v1845
      %v1847 = vpop.f32.mrf.mxu0
      %1848 = vmatprep.mubr.f32.mxu0 0.0
      %1849 = vmatmul.mubr.f32.gmra.mxu0 %v1640
      %v1850 = vpop.f32.mrf.mxu0
      %v1851 = vadd.f32 %v1617, %v1850
      %v1852 = vpop.f32.mrf.mxu0
      %1853 = vmatprep.mubr.f32.mxu0 0.0
      %1854 = vmatmul.mubr.f32.gmra.mxu0 %v1642
      %v1855 = vpop.f32.mrf.mxu0
      %v1856 = vadd.f32 %v1622, %v1855
      %v1857 = vpop.f32.mrf.mxu0
      %1858 = vmatprep.mubr.f32.mxu0 0.0
      %1859 = vmatmul.mubr.f32.gmra.mxu0 %v1644
      %v1860 = vpop.f32.mrf.mxu0
      %v1861 = vadd.f32 %v1627, %v1860
      %v1862 = vpop.f32.mrf.mxu0
      %1863 = vdwg.mxu0
      %1888 = vrot.lane.b32.xlu0 %v1713, 127
      %v1889 = vpop.permute.xlu0 %1888
      %1890 = vrot.lane.b32.xlu0 %v1715, 127
      %v1891 = vpop.permute.xlu0 %1890
      %1892 = vrot.lane.b32.xlu0 %v1826, 127
      %v1893 = vpop.permute.xlu0 %1892
      %1894 = vrot.lane.b32.xlu0 %v1719, 127
      %v1895 = vpop.permute.xlu0 %1894
      %1896 = vrot.lane.b32.xlu0 %v1721, 127
      %v1897 = vpop.permute.xlu0 %1896
      %1898 = vrot.lane.b32.xlu0 %v1831, 127
      %v1899 = vpop.permute.xlu0 %1898
      %1900 = vrot.lane.b32.xlu0 %v1725, 127
      %v1901 = vpop.permute.xlu0 %1900
      %1902 = vrot.lane.b32.xlu0 %v1727, 127
      %v1903 = vpop.permute.xlu0 %1902
      %1904 = vrot.lane.b32.xlu0 %v1836, 127
      %v1905 = vpop.permute.xlu0 %1904
      %1906 = vrot.lane.b32.xlu0 %v1731, 127
      %v1907 = vpop.permute.xlu0 %1906
      %1908 = vrot.lane.b32.xlu0 %v1733, 127
      %v1909 = vpop.permute.xlu0 %1908
      %1910 = vrot.lane.b32.xlu0 %v1841, 127
      %v1911 = vpop.permute.xlu0 %1910
      %1912 = vrot.lane.b32.xlu0 %v1737, 127
      %v1913 = vpop.permute.xlu0 %1912
      %1914 = vrot.lane.b32.xlu0 %v1739, 127
      %v1915 = vpop.permute.xlu0 %1914
      %1916 = vrot.lane.b32.xlu0 %v1846, 127
      %v1917 = vpop.permute.xlu0 %1916
      %1918 = vrot.lane.b32.xlu0 %v1743, 127
      %v1919 = vpop.permute.xlu0 %1918
      %1920 = vrot.lane.b32.xlu0 %v1745, 127
      %v1921 = vpop.permute.xlu0 %1920
      %1922 = vrot.lane.b32.xlu0 %v1851, 127
      %v1923 = vpop.permute.xlu0 %1922
      %1924 = vrot.lane.b32.xlu0 %v1749, 127
      %v1925 = vpop.permute.xlu0 %1924
      %1926 = vrot.lane.b32.xlu0 %v1751, 127
      %v1927 = vpop.permute.xlu0 %1926
      %1928 = vrot.lane.b32.xlu0 %v1856, 127
      %v1929 = vpop.permute.xlu0 %1928
      %1930 = vrot.lane.b32.xlu0 %v1755, 127
      %v1931 = vpop.permute.xlu0 %1930
      %1932 = vrot.lane.b32.xlu0 %v1757, 127
      %v1933 = vpop.permute.xlu0 %1932
      %1934 = vrot.lane.b32.xlu0 %v1861, 127
      %v1935 = vpop.permute.xlu0 %1934
      %v1936 = vsel %vm691, %v1889, %v1891
      %v1937 = vsel %vm691, %v1891, %v1893
      %v1938 = vsel %vm691, %v1895, %v1897
      %v1939 = vsel %vm691, %v1897, %v1899
      %v1940 = vsel %vm691, %v1901, %v1903
      %v1941 = vsel %vm691, %v1903, %v1905
      %v1942 = vsel %vm691, %v1907, %v1909
      %v1943 = vsel %vm691, %v1909, %v1911
      %v1944 = vsel %vm691, %v1913, %v1915
      %v1945 = vsel %vm691, %v1915, %v1917
      %v1946 = vsel %vm691, %v1919, %v1921
      %v1947 = vsel %vm691, %v1921, %v1923
      %v1948 = vsel %vm691, %v1925, %v1927
      %v1949 = vsel %vm691, %v1927, %v1929
      %v1950 = vsel %vm691, %v1931, %v1933
      %v1951 = vsel %vm691, %v1933, %v1935
      %v1976 = vsel %vm1584, %v1893, %v1826
      %v1977 = vsel %vm1584, %v1899, %v1831
      %v1978 = vsel %vm1584, %v1905, %v1836
      %v1979 = vsel %vm1584, %v1911, %v1841
      %v1980 = vsel %vm1584, %v1917, %v1846
      %v1981 = vsel %vm1584, %v1923, %v1851
      %v1982 = vsel %vm1584, %v1929, %v1856
      %v1983 = vsel %vm1584, %v1935, %v1861
      %v1984 = vmax.f32 %v1713, %v1936
      %v1985 = vmax.f32 %v1715, %v1937
      %v1986 = vmax.f32 %v1826, %v1976
      %v1987 = vmax.f32 %v1719, %v1938
      %v1988 = vmax.f32 %v1721, %v1939
      %v1989 = vmax.f32 %v1831, %v1977
      %v1990 = vmax.f32 %v1725, %v1940
      %v1991 = vmax.f32 %v1727, %v1941
      %v1992 = vmax.f32 %v1836, %v1978
      %v1993 = vmax.f32 %v1731, %v1942
      %v1994 = vmax.f32 %v1733, %v1943
      %v1995 = vmax.f32 %v1841, %v1979
      %v1996 = vmax.f32 %v1737, %v1944
      %v1997 = vmax.f32 %v1739, %v1945
      %v1998 = vmax.f32 %v1846, %v1980
      %v1999 = vmax.f32 %v1743, %v1946
      %v2000 = vmax.f32 %v1745, %v1947
      %v2001 = vmax.f32 %v1851, %v1981
      %v2002 = vmax.f32 %v1749, %v1948
      %v2003 = vmax.f32 %v1751, %v1949
      %v2004 = vmax.f32 %v1856, %v1982
      %v2005 = vmax.f32 %v1755, %v1950
      %v2006 = vmax.f32 %v1757, %v1951
      %v2007 = vmax.f32 %v1861, %v1983
      %v2008 = vmul.f32 %v1984, %v492
      %v2009 = vmul.f32 %v1985, %v493
      %v2010 = vmul.f32 %v1986, %v494
      %v2011 = vmul.f32 %v1987, %v495
      %v2012 = vmul.f32 %v1988, %v496
      %v2013 = vmul.f32 %v1989, %v497
      %v2014 = vmul.f32 %v1990, %v498
      %v2015 = vmul.f32 %v1991, %v499
      %v2016 = vmul.f32 %v1992, %v500
      %v2017 = vmul.f32 %v1993, %v501
      %v2018 = vmul.f32 %v1994, %v502
      %v2019 = vmul.f32 %v1995, %v503
      %v2020 = vmul.f32 %v1996, %v504
      %v2021 = vmul.f32 %v1997, %v505
      %v2022 = vmul.f32 %v1998, %v506
      %v2023 = vmul.f32 %v1999, %v507
      %v2024 = vmul.f32 %v2000, %v508
      %v2025 = vmul.f32 %v2001, %v509
      %v2026 = vmul.f32 %v2002, %v510
      %v2027 = vmul.f32 %v2003, %v511
      %v2028 = vmul.f32 %v2004, %v512
      %v2029 = vmul.f32 %v2005, %v513
      %v2030 = vmul.f32 %v2006, %v514
      %v2031 = vmul.f32 %v2007, %v515
      %v2032 = vadd.f32 %v2008, %v2009
      %vm2033 = vcmask 441344
      %v2034 = vsel %vm2033, %v2010, 0.0
      %v2035 = vadd.f32 %v2032, %v2034
      %2036 = vadd.xlane.f32.xlu0 %v2035
      %v2037 = vpop.xlane.xlu0 %2036
      %v2038 = vadd.f32 %v2011, %v2012
      %v2039 = vsel %vm2033, %v2013, 0.0
      %v2040 = vadd.f32 %v2038, %v2039
      %2041 = vadd.xlane.f32.xlu0 %v2040
      %v2042 = vpop.xlane.xlu0 %2041
      %v2043 = vadd.f32 %v2014, %v2015
      %v2044 = vsel %vm2033, %v2016, 0.0
      %v2045 = vadd.f32 %v2043, %v2044
      %2046 = vadd.xlane.f32.xlu0 %v2045
      %v2047 = vpop.xlane.xlu0 %2046
      %v2048 = vadd.f32 %v2017, %v2018
      %v2049 = vsel %vm2033, %v2019, 0.0
      %v2050 = vadd.f32 %v2048, %v2049
      %2051 = vadd.xlane.f32.xlu0 %v2050
      %v2052 = vpop.xlane.xlu0 %2051
      %v2053 = vadd.f32 %v2020, %v2021
      %v2054 = vsel %vm2033, %v2022, 0.0
      %v2055 = vadd.f32 %v2053, %v2054
      %2056 = vadd.xlane.f32.xlu0 %v2055
      %v2057 = vpop.xlane.xlu0 %2056
      %v2058 = vadd.f32 %v2023, %v2024
      %v2059 = vsel %vm2033, %v2025, 0.0
      %v2060 = vadd.f32 %v2058, %v2059
      %2061 = vadd.xlane.f32.xlu0 %v2060
      %v2062 = vpop.xlane.xlu0 %2061
      %v2063 = vadd.f32 %v2026, %v2027
      %v2064 = vsel %vm2033, %v2028, 0.0
      %v2065 = vadd.f32 %v2063, %v2064
      %2066 = vadd.xlane.f32.xlu0 %v2065
      %v2067 = vpop.xlane.xlu0 %2066
      %v2068 = vadd.f32 %v2029, %v2030
      %v2069 = vsel %vm2033, %v2031, 0.0
      %v2070 = vadd.f32 %v2068, %v2069
      %2071 = vadd.xlane.f32.xlu0 %v2070
      %v2072 = vpop.xlane.xlu0 %2071
      %v2073 = vadd.f32 %v2037, %v2042
      %v2074 = vadd.f32 %v2073, %v2047
      %v2075 = vadd.f32 %v2074, %v2052
      %v2076 = vadd.f32 %v2075, %v2057
      %v2077 = vadd.f32 %v2076, %v2062
      %v2078 = vadd.f32 %v2077, %v2067
      %v2079 = vadd.f32 %v2078, %v2072
      %v2080 = vrot.slane %v2079, 4
      %v2081 = vadd.f32 %v2079, %v2080
      %v2082 = vrot.slane %v2081, 2
      %v2083 = vadd.f32 %v2081, %v2082
      %v2084 = vrot.slane %v2083, 1
      %v2085 = vadd.f32 %v2083, %v2084
      %v2086 = vstv %s516
      %v2087 = vadd.f32 %v2085, %v2086
      %vm2088 = vcmask 0
      %2089 = vst.msk [vmem:[%s245] sm:$0x1] %vm2088, %v2087
      %p2090 = scmp.lt.s32.totalorder %s18, 1
      %s2091 = scalar_select %p2090, %s18, 1
      %s2092 = scalar_lea.vmem %s6, %s2091
      // Predicated region
      $region45: #{tpu_custom_call.1} parent=43 // pred_check
        %p2093 = pneg %p167
      $region46: #{tpu_custom_call.1} parent=43 // pred_check_branch
        %2095 = sbr.rel (%p2093) target = $region48
      $region47: #{tpu_custom_call.1} parent=43 // pred_region
        _
      $region48: #{tpu_custom_call.1} parent=43 // pred_fallthru
        _
    $region44: #{tpu_custom_call.1} parent=5 // pred_fallthru
      _
    %p2096 = scmp.le.s32.totalorder 2, %s13
    // Predicated region
    $region49: #{tpu_custom_call.1} parent=5 // pred_check
      %p2097 = pneg %p2096
    $region50: #{tpu_custom_call.1} parent=5 // pred_check_branch
      %2099 = sbr.rel (%p2097) target = $region52
    $region51: #{tpu_custom_call.1} parent=5 // pred_region
      %s2100 = ssub.s32 %s13, 2
      // Predicated region
      $region53: #{tpu_custom_call.1} parent=51 // pred_check
        %p2101 = pneg %p173
      $region54: #{tpu_custom_call.1} parent=51 // pred_check_branch
        %2103 = sbr.rel (%p2101) target = $region56
      $region55: #{tpu_custom_call.1} parent=51 // pred_region
        %p2104 = scmp.lt.s32.totalorder %s19, 1
        %s2105 = scalar_select %p2104, %s19, 1
        %s2106 = scalar_lea.vmem %s6, %s2105
      $region56: #{tpu_custom_call.1} parent=51 // pred_fallthru
        _
    $region52: #{tpu_custom_call.1} parent=5 // pred_fallthru
      _
  $region6: #{tpu_custom_call.1} parent=0 // loop_footer
    %s17 = sadd.s32 1, %s13
  $region7: #{tpu_custom_call.1} parent=0 // loop_footer_branch
    %12 = sbr.rel target = $region3
  $region8: #{tpu_custom_call.1} parent=0 // loop_exit
    _

</llo_original>
